<compile_context>
chip_gen: v5e
topology: v5e:2x2
jax: 0.10.0
libtpu: 0.0.40
codegen_flags: <defaults>
</compile_context>

<pallas_src>
import functools

import jax
import jax.numpy as jnp
from jax.experimental import pallas as pl
from jax.experimental.pallas import tpu as pltpu

LANE = 128
SUBLANE = 8


def _round_up(x, m):
    return (x + m - 1) // m * m


@functools.lru_cache(maxsize=None)
def _num_tensorcores():
    """Best-effort TensorCore-per-chip count (v7x: 2, v5e/v6e: 1)."""
    try:
        info = pltpu.get_tpu_info()
        for attr in ("num_cores", "num_tensorcores", "tensorcore_count",
                     "cores_per_chip"):
            n = getattr(info, attr, None)
            if isinstance(n, int) and 1 <= n <= 16:
                return n
    except Exception:
        pass
    try:
        kind = jax.devices()[0].device_kind.lower()
        if "v7" in kind:
            return 2
    except Exception:
        pass
    return 1


def mlp_actor_kernel(x_ref, w1_ref, b1_ref, w2_ref, b2_ref, w3_ref, b3_ref,
                     mu_ref):
    dot_dtype = w1_ref.dtype  # f32 (exact) or bf16 (fast MXU path on v6e/v7x)
    # hidden layer 1: tanh(x @ W1 + b1)   (bias add + tanh stay in f32)
    h = jnp.tanh(
        jnp.dot(x_ref[...], w1_ref[...], preferred_element_type=jnp.float32)
        + b1_ref[...])
    # hidden layer 2: tanh(h @ W2 + b2)
    h = jnp.tanh(
        jnp.dot(h.astype(dot_dtype), w2_ref[...],
                preferred_element_type=jnp.float32) + b2_ref[...])
    # output layer (identity activation); lane-dense (columns padded to 128)
    mu = (jnp.dot(h.astype(dot_dtype), w3_ref[...],
                  preferred_element_type=jnp.float32) + b3_ref[...])
    mu_ref[...] = mu.astype(mu_ref.dtype)


def prepare_params(params, *, dot_dtype=jnp.float32):
    """One-time parameter prep, hoisted out of the per-call forward path.

    * zero-pads W3/b3 output columns to a multiple of 128 lanes so the mu
      store is an unmasked full-lane vst,
    * casts weight matrices to the MXU operand dtype (f32 or bf16),
    * precomputes std = exp(log_std) (obs-independent).
    """
    w1, b1, w2, b2, w3, b3, log_std = params
    act_dim = w3.shape[1]
    act_pad = _round_up(act_dim, LANE)
    if act_pad != act_dim:
        w3 = jnp.zeros((w3.shape[0], act_pad), w3.dtype).at[:, :act_dim].set(w3)
        b3 = jnp.zeros((1, act_pad), b3.dtype).at[:, :act_dim].set(b3)
    weights = (
        w1.astype(dot_dtype), b1.astype(jnp.float32),
        w2.astype(dot_dtype), b2.astype(jnp.float32),
        w3.astype(dot_dtype), b3.astype(jnp.float32),
    )
    return {
        "weights": weights,
        "std_row": jnp.exp(log_std).astype(jnp.float32),  # (1, act_dim)
        "act_dim": act_dim,
        "dot_dtype": jnp.dtype(dot_dtype),
    }


def _build_call(tb, n_steps, obs_dim, act_pad, weight_shapes,
                single_buffer_weights):
    def row_spec(last):
        # batch-tiled stream (obs in, mu out)
        return pl.BlockSpec((tb, last), lambda i: (i, 0))

    def resident_spec(shape):
        # constant index_map: fetched once, stays VMEM-resident across steps.
        kwargs = {}
        if single_buffer_weights:
            kwargs["pipeline_mode"] = pl.Buffered(1)  # no second DMA buffer
        return pl.BlockSpec(shape, lambda i: (0, 0), **kwargs)

    return pl.pallas_call(
        mlp_actor_kernel,
        out_shape=jax.ShapeDtypeStruct((tb * n_steps, act_pad), jnp.float32),
        grid=(n_steps,),
        in_specs=[row_spec(obs_dim)]
        + [resident_spec(s) for s in weight_shapes],
        out_specs=row_spec(act_pad),
        compiler_params=pltpu.CompilerParams(
            # Batch axis is embarrassingly parallel: with grid=(2,) it shards
            # across the two TensorCores on v7x; a no-op on v5e/v6e.
            dimension_semantics=("parallel",),
        ),
    )


def mlp_actor_forward(obs, prepared, *, block_b=None, num_cores=None):
    """Returns (mu, std) parameterizing Normal(mu, std) = MLPActor.forward(obs)."""
    weights = prepared["weights"]
    act_dim = prepared["act_dim"]
    in_dtype = prepared["dot_dtype"]
    obs_dim = weights[0].shape[0]
    act_pad = weights[4].shape[1]
    B = obs.shape[0]

    # Sublane alignment of the batch tile: 8 rows for f32, 16 for bf16 operands.
    row_align = SUBLANE * (4 // in_dtype.itemsize)

    if num_cores is None:
        num_cores = _num_tensorcores()

    b_al = _round_up(B, row_align)
    if block_b is None:
        # One grid step per TensorCore: grid=(1,) on v5e/v6e, grid=(2,) on v7x.
        # Grid steps are a serial loop on a single TC, so extra steps are pure
        # per-step (~0.35 us) overhead unless they land on another core.
        target_steps = max(1, min(num_cores, b_al // row_align))
        tb = _round_up(pl.cdiv(b_al, target_steps), row_align)
    else:
        tb = _round_up(min(block_b, b_al), row_align)

    # VMEM per step ~= 2*tb*(obs_dim + act_pad)*4 bytes (pipelined obs + mu
    # tiles) + resident weights. Cap tb so the streamed tiles stay well under
    # the ~32 MiB scoped limit (v7x has only 64 MiB physical VMEM).
    tb_cap = (16 * 1024 * 1024) // (2 * 4 * (obs_dim + act_pad))
    tb_cap = max(row_align, tb_cap // row_align * row_align)
    tb = min(tb, tb_cap)

    b_pad = _round_up(B, tb)
    n_steps = b_pad // tb

    # Per-call obs prep: dtype cast (no-op for f32) and pad only when needed.
    obs_p = obs.astype(in_dtype)
    if b_pad != B:
        obs_p = jnp.zeros((b_pad, obs_dim), in_dtype).at[:B].set(obs_p)

    args = (obs_p,) + weights
    weight_shapes = tuple(w.shape for w in weights)
    try:
        mu_p = _build_call(tb, n_steps, obs_dim, act_pad, weight_shapes,
                           single_buffer_weights=True)(*args)
    except Exception:
        # pipeline_mode=pl.Buffered(1) unsupported on this JAX build: fall
        # back to default (double-buffered) resident specs.
        mu_p = _build_call(tb, n_steps, obs_dim, act_pad, weight_shapes,
                           single_buffer_weights=False)(*args)

    mu = mu_p[:B, :act_dim]
    # std = exp(log_std) is obs-independent: precomputed in prepare_params.
    std = jnp.broadcast_to(prepared["std_row"], (B, act_dim))
    return mu, std


def init_params(key, obs_dim, hidden_sizes, act_dim):
    """Deterministic synthetic init mirroring the module's parameter shapes."""
    sizes = [obs_dim] + list(hidden_sizes) + [act_dim]
    keys = jax.random.split(key, 2 * (len(sizes) - 1))
    params = []
    for i in range(len(sizes) - 1):
        fan_in, fan_out = sizes[i], sizes[i + 1]
        bound = 1.0 / jnp.sqrt(jnp.float32(fan_in))
        w = jax.random.uniform(keys[2 * i], (fan_in, fan_out),
                               minval=-bound, maxval=bound, dtype=jnp.float32)
        b = jax.random.uniform(keys[2 * i + 1], (1, fan_out),
                               minval=-bound, maxval=bound, dtype=jnp.float32)
        params += [w, b]
    # log_std parameter initialized to -0.5 (as in GaussianActorCritic.__init__)
    log_std = jnp.full((1, act_dim), -0.5, dtype=jnp.float32)
    params.append(log_std)
    return tuple(params)


def reference_forward(obs, params, dot_dtype=jnp.float32):
    w1, b1, w2, b2, w3, b3, log_std = params
    d = dot_dtype
    h = jnp.tanh(jnp.dot(obs.astype(d), w1.astype(d),
                         preferred_element_type=jnp.float32) + b1)
    h = jnp.tanh(jnp.dot(h.astype(d), w2.astype(d),
                         preferred_element_type=jnp.float32) + b2)
    mu = jnp.dot(h.astype(d), w3.astype(d),
                 preferred_element_type=jnp.float32) + b3
    std = jnp.broadcast_to(jnp.exp(log_std), mu.shape)
    return mu, std


if __name__ == "__main__":
    # Gaussian MLPActor shapes: batch=256 (RL rollout minibatch), obs_dim=16,
    # hidden_sizes=[64, 64] (spinup default), act_dim=4 (Box action space).
    B, OBS_DIM, HIDDEN, ACT_DIM = 256, 16, [64, 64], 4

    key = jax.random.PRNGKey(0)
    k_obs, k_par = jax.random.split(key)
    obs = jax.random.normal(k_obs, (B, OBS_DIM), dtype=jnp.float32)
    params = init_params(k_par, OBS_DIM, HIDDEN, ACT_DIM)

    # --- exact f32 path (matches the PyTorch module's numerics) ---
    prep_f32 = prepare_params(params, dot_dtype=jnp.float32)
    mu, std = mlp_actor_forward(obs, prep_f32)
    mu = jax.block_until_ready(mu)
    std = jax.block_until_ready(std)
    mu_ref, std_ref = reference_forward(obs, params)
    assert mu.shape == (B, ACT_DIM) and std.shape == (B, ACT_DIM)
    assert jnp.allclose(mu, mu_ref, atol=1e-5, rtol=1e-5)
    assert jnp.allclose(std, std_ref, atol=1e-6, rtol=1e-6)

    # --- bf16 MXU-operand path (v6e/v7x perf option; f32 accumulation) ---
    prep_bf16 = prepare_params(params, dot_dtype=jnp.bfloat16)
    mu16, std16 = mlp_actor_forward(obs, prep_bf16)
    mu16 = jax.block_until_ready(mu16)
    mu_ref16, _ = reference_forward(obs, params, dot_dtype=jnp.bfloat16)
    assert mu16.shape == (B, ACT_DIM) and std16.shape == (B, ACT_DIM)
    assert jnp.allclose(mu16, mu_ref16, atol=2e-3, rtol=2e-3)

    # TODO(synk): Normal.sample()/log_prob/entropy are torch.distributions
    # object ops; the kernel returns the defining parameters (mu, std).
    print("KERNEL_OK")
</pallas_src>

<mosaic_0001>
module attributes {stable_mosaic.version = 11 : i64} {
  func.func @mlp_actor_kernel(%arg0: i32, %arg1: memref<256x16xf32, #tpu.memory_space<vmem>>, %arg2: memref<16x64xf32, #tpu.memory_space<vmem>>, %arg3: memref<1x64xf32, #tpu.memory_space<vmem>>, %arg4: memref<64x64xf32, #tpu.memory_space<vmem>>, %arg5: memref<1x64xf32, #tpu.memory_space<vmem>>, %arg6: memref<64x128xf32, #tpu.memory_space<vmem>>, %arg7: memref<1x128xf32, #tpu.memory_space<vmem>>, %arg8: memref<256x128xf32, #tpu.memory_space<vmem>>) attributes {dimension_semantics = [#tpu.dimension_semantics<parallel>], iteration_bounds = array<i64: 1>, scalar_prefetch = 0 : i64, scratch_operands = 0 : i64, tpu.core_type = #tpu.core_type<tc>, window_params = [{transform_indices = @transform_0, window_bounds = array<i64: 256, 16>}, {pipeline_mode = #tpu.pipeline_mode<synchronous>, transform_indices = @transform_1, window_bounds = array<i64: 16, 64>}, {pipeline_mode = #tpu.pipeline_mode<synchronous>, transform_indices = @transform_2, window_bounds = array<i64: 1, 64>}, {pipeline_mode = #tpu.pipeline_mode<synchronous>, transform_indices = @transform_3, window_bounds = array<i64: 64, 64>}, {pipeline_mode = #tpu.pipeline_mode<synchronous>, transform_indices = @transform_4, window_bounds = array<i64: 1, 64>}, {pipeline_mode = #tpu.pipeline_mode<synchronous>, transform_indices = @transform_5, window_bounds = array<i64: 64, 128>}, {pipeline_mode = #tpu.pipeline_mode<synchronous>, transform_indices = @transform_6, window_bounds = array<i64: 1, 128>}, {transform_indices = @transform_7, window_bounds = array<i64: 256, 128>}]} {
    %c0 = arith.constant 0 : index
    %c0_0 = arith.constant 0 : index
    %0 = vector.load %arg1[%c0, %c0_0] : memref<256x16xf32, #tpu.memory_space<vmem>>, vector<256x16xf32>
    %c0_1 = arith.constant 0 : index
    %c0_2 = arith.constant 0 : index
    %1 = vector.load %arg2[%c0_1, %c0_2] : memref<16x64xf32, #tpu.memory_space<vmem>>, vector<16x64xf32>
    %cst = arith.constant dense<0.000000e+00> : vector<256x64xf32>
    %2 = tpu.matmul %0, %1, %cst {dimension_numbers = #tpu.dot_dimension_numbers<[1], [0], [0], [1], [0, 0, 1, 1], [], []>} : vector<256x16xf32>, vector<16x64xf32>, vector<256x64xf32> -> vector<256x64xf32>
    %c0_3 = arith.constant 0 : index
    %c0_4 = arith.constant 0 : index
    %3 = vector.load %arg3[%c0_3, %c0_4] : memref<1x64xf32, #tpu.memory_space<vmem>>, vector<1x64xf32>
    %4 = vector.broadcast %3 : vector<1x64xf32> to vector<256x64xf32>
    %5 = arith.addf %2, %4 : vector<256x64xf32>
    %6 = math.tanh %5 : vector<256x64xf32>
    %c0_5 = arith.constant 0 : index
    %c0_6 = arith.constant 0 : index
    %7 = vector.load %arg4[%c0_5, %c0_6] : memref<64x64xf32, #tpu.memory_space<vmem>>, vector<64x64xf32>
    %cst_7 = arith.constant dense<0.000000e+00> : vector<256x64xf32>
    %8 = tpu.matmul %6, %7, %cst_7 {dimension_numbers = #tpu.dot_dimension_numbers<[1], [0], [0], [1], [0, 0, 1, 1], [], []>} : vector<256x64xf32>, vector<64x64xf32>, vector<256x64xf32> -> vector<256x64xf32>
    %c0_8 = arith.constant 0 : index
    %c0_9 = arith.constant 0 : index
    %9 = vector.load %arg5[%c0_8, %c0_9] : memref<1x64xf32, #tpu.memory_space<vmem>>, vector<1x64xf32>
    %10 = vector.broadcast %9 : vector<1x64xf32> to vector<256x64xf32>
    %11 = arith.addf %8, %10 : vector<256x64xf32>
    %12 = math.tanh %11 : vector<256x64xf32>
    %c0_10 = arith.constant 0 : index
    %c0_11 = arith.constant 0 : index
    %13 = vector.load %arg6[%c0_10, %c0_11] : memref<64x128xf32, #tpu.memory_space<vmem>>, vector<64x128xf32>
    %cst_12 = arith.constant dense<0.000000e+00> : vector<256x128xf32>
    %14 = tpu.matmul %12, %13, %cst_12 {dimension_numbers = #tpu.dot_dimension_numbers<[1], [0], [0], [1], [0, 0, 1, 1], [], []>} : vector<256x64xf32>, vector<64x128xf32>, vector<256x128xf32> -> vector<256x128xf32>
    %c0_13 = arith.constant 0 : index
    %c0_14 = arith.constant 0 : index
    %15 = vector.load %arg7[%c0_13, %c0_14] : memref<1x128xf32, #tpu.memory_space<vmem>>, vector<1x128xf32>
    %16 = vector.broadcast %15 : vector<1x128xf32> to vector<256x128xf32>
    %17 = arith.addf %14, %16 : vector<256x128xf32>
    %c0_15 = arith.constant 0 : index
    %c0_16 = arith.constant 0 : index
    %18 = vector.load %arg8[%c0_15, %c0_16] : memref<256x128xf32, #tpu.memory_space<vmem>>, vector<256x128xf32>
    tpu.vector_store %arg8[%c0_15, %c0_16], %17 {strides = array<i32>} : memref<256x128xf32, #tpu.memory_space<vmem>>, vector<256x128xf32>,
    return
  }
  func.func @transform_0(%arg0: i32) -> (i32, i32) {
    %c0_i32 = arith.constant 0 : i32
    %c0_i32_0 = arith.constant 0 : i32
    return %arg0, %c0_i32 : i32, i32
  }
  func.func @transform_1(%arg0: i32) -> (i32, i32) {
    %c0_i32 = arith.constant 0 : i32
    %c0_i32_0 = arith.constant 0 : i32
    %c0_i32_1 = arith.constant 0 : i32
    return %c0_i32, %c0_i32_0 : i32, i32
  }
  func.func @transform_2(%arg0: i32) -> (i32, i32) {
    %c0_i32 = arith.constant 0 : i32
    %c0_i32_0 = arith.constant 0 : i32
    %c0_i32_1 = arith.constant 0 : i32
    return %c0_i32, %c0_i32_0 : i32, i32
  }
  func.func @transform_3(%arg0: i32) -> (i32, i32) {
    %c0_i32 = arith.constant 0 : i32
    %c0_i32_0 = arith.constant 0 : i32
    %c0_i32_1 = arith.constant 0 : i32
    return %c0_i32, %c0_i32_0 : i32, i32
  }
  func.func @transform_4(%arg0: i32) -> (i32, i32) {
    %c0_i32 = arith.constant 0 : i32
    %c0_i32_0 = arith.constant 0 : i32
    %c0_i32_1 = arith.constant 0 : i32
    return %c0_i32, %c0_i32_0 : i32, i32
  }
  func.func @transform_5(%arg0: i32) -> (i32, i32) {
    %c0_i32 = arith.constant 0 : i32
    %c0_i32_0 = arith.constant 0 : i32
    %c0_i32_1 = arith.constant 0 : i32
    return %c0_i32, %c0_i32_0 : i32, i32
  }
  func.func @transform_6(%arg0: i32) -> (i32, i32) {
    %c0_i32 = arith.constant 0 : i32
    %c0_i32_0 = arith.constant 0 : i32
    %c0_i32_1 = arith.constant 0 : i32
    return %c0_i32, %c0_i32_0 : i32, i32
  }
  func.func @transform_7(%arg0: i32) -> (i32, i32) {
    %c0_i32 = arith.constant 0 : i32
    %c0_i32_0 = arith.constant 0 : i32
    return %arg0, %c0_i32 : i32, i32
  }
}

module attributes {stable_mosaic.version = 11 : i64} {
  func.func @mlp_actor_kernel(%arg0: i32, %arg1: memref<256x16xf32, #tpu.memory_space<vmem>>, %arg2: memref<16x64xf32, #tpu.memory_space<vmem>>, %arg3: memref<1x64xf32, #tpu.memory_space<vmem>>, %arg4: memref<64x64xf32, #tpu.memory_space<vmem>>, %arg5: memref<1x64xf32, #tpu.memory_space<vmem>>, %arg6: memref<64x128xf32, #tpu.memory_space<vmem>>, %arg7: memref<1x128xf32, #tpu.memory_space<vmem>>, %arg8: memref<256x128xf32, #tpu.memory_space<vmem>>) attributes {dimension_semantics = [#tpu.dimension_semantics<parallel>], iteration_bounds = array<i64: 1>, scalar_prefetch = 0 : i64, scratch_operands = 0 : i64, tpu.core_type = #tpu.core_type<tc>, window_params = [{transform_indices = @transform_0, window_bounds = array<i64: 256, 16>}, {pipeline_mode = #tpu.pipeline_mode<synchronous>, transform_indices = @transform_1, window_bounds = array<i64: 16, 64>}, {pipeline_mode = #tpu.pipeline_mode<synchronous>, transform_indices = @transform_2, window_bounds = array<i64: 1, 64>}, {pipeline_mode = #tpu.pipeline_mode<synchronous>, transform_indices = @transform_3, window_bounds = array<i64: 64, 64>}, {pipeline_mode = #tpu.pipeline_mode<synchronous>, transform_indices = @transform_4, window_bounds = array<i64: 1, 64>}, {pipeline_mode = #tpu.pipeline_mode<synchronous>, transform_indices = @transform_5, window_bounds = array<i64: 64, 128>}, {pipeline_mode = #tpu.pipeline_mode<synchronous>, transform_indices = @transform_6, window_bounds = array<i64: 1, 128>}, {transform_indices = @transform_7, window_bounds = array<i64: 256, 128>}]} {
    %c0 = arith.constant 0 : index
    %c0_0 = arith.constant 0 : index
    %0 = vector.load %arg1[%c0, %c0_0] : memref<256x16xf32, #tpu.memory_space<vmem>>, vector<256x16xf32>
    %c0_1 = arith.constant 0 : index
    %c0_2 = arith.constant 0 : index
    %1 = vector.load %arg2[%c0_1, %c0_2] : memref<16x64xf32, #tpu.memory_space<vmem>>, vector<16x64xf32>
    %cst = arith.constant dense<0.000000e+00> : vector<256x64xf32>
    %2 = tpu.matmul %0, %1, %cst {dimension_numbers = #tpu.dot_dimension_numbers<[1], [0], [0], [1], [0, 0, 1, 1], [], []>} : vector<256x16xf32>, vector<16x64xf32>, vector<256x64xf32> -> vector<256x64xf32>
    %c0_3 = arith.constant 0 : index
    %c0_4 = arith.constant 0 : index
    %3 = vector.load %arg3[%c0_3, %c0_4] : memref<1x64xf32, #tpu.memory_space<vmem>>, vector<1x64xf32>
    %4 = vector.broadcast %3 : vector<1x64xf32> to vector<256x64xf32>
    %5 = arith.addf %2, %4 : vector<256x64xf32>
    %6 = math.tanh %5 : vector<256x64xf32>
    %c0_5 = arith.constant 0 : index
    %c0_6 = arith.constant 0 : index
    %7 = vector.load %arg4[%c0_5, %c0_6] : memref<64x64xf32, #tpu.memory_space<vmem>>, vector<64x64xf32>
    %cst_7 = arith.constant dense<0.000000e+00> : vector<256x64xf32>
    %8 = tpu.matmul %6, %7, %cst_7 {dimension_numbers = #tpu.dot_dimension_numbers<[1], [0], [0], [1], [0, 0, 1, 1], [], []>} : vector<256x64xf32>, vector<64x64xf32>, vector<256x64xf32> -> vector<256x64xf32>
    %c0_8 = arith.constant 0 : index
    %c0_9 = arith.constant 0 : index
    %9 = vector.load %arg5[%c0_8, %c0_9] : memref<1x64xf32, #tpu.memory_space<vmem>>, vector<1x64xf32>
    %10 = vector.broadcast %9 : vector<1x64xf32> to vector<256x64xf32>
    %11 = arith.addf %8, %10 : vector<256x64xf32>
    %12 = math.tanh %11 : vector<256x64xf32>
    %c0_10 = arith.constant 0 : index
    %c0_11 = arith.constant 0 : index
    %13 = vector.load %arg6[%c0_10, %c0_11] : memref<64x128xf32, #tpu.memory_space<vmem>>, vector<64x128xf32>
    %cst_12 = arith.constant dense<0.000000e+00> : vector<256x128xf32>
    %14 = tpu.matmul %12, %13, %cst_12 {dimension_numbers = #tpu.dot_dimension_numbers<[1], [0], [0], [1], [0, 0, 1, 1], [], []>} : vector<256x64xf32>, vector<64x128xf32>, vector<256x128xf32> -> vector<256x128xf32>
    %c0_13 = arith.constant 0 : index
    %c0_14 = arith.constant 0 : index
    %15 = vector.load %arg7[%c0_13, %c0_14] : memref<1x128xf32, #tpu.memory_space<vmem>>, vector<1x128xf32>
    %16 = vector.broadcast %15 : vector<1x128xf32> to vector<256x128xf32>
    %17 = arith.addf %14, %16 : vector<256x128xf32>
    %c0_15 = arith.constant 0 : index
    %c0_16 = arith.constant 0 : index
    %18 = vector.load %arg8[%c0_15, %c0_16] : memref<256x128xf32, #tpu.memory_space<vmem>>, vector<256x128xf32>
    tpu.vector_store %arg8[%c0_15, %c0_16], %17 {strides = array<i32>} : memref<256x128xf32, #tpu.memory_space<vmem>>, vector<256x128xf32>,
    return
  }
  func.func @transform_0(%arg0: i32) -> (i32, i32) {
    %c0_i32 = arith.constant 0 : i32
    %c0_i32_0 = arith.constant 0 : i32
    return %arg0, %c0_i32 : i32, i32
  }
  func.func @transform_1(%arg0: i32) -> (i32, i32) {
    %c0_i32 = arith.constant 0 : i32
    %c0_i32_0 = arith.constant 0 : i32
    %c0_i32_1 = arith.constant 0 : i32
    return %c0_i32, %c0_i32_0 : i32, i32
  }
  func.func @transform_2(%arg0: i32) -> (i32, i32) {
    %c0_i32 = arith.constant 0 : i32
    %c0_i32_0 = arith.constant 0 : i32
    %c0_i32_1 = arith.constant 0 : i32
    return %c0_i32, %c0_i32_0 : i32, i32
  }
  func.func @transform_3(%arg0: i32) -> (i32, i32) {
    %c0_i32 = arith.constant 0 : i32
    %c0_i32_0 = arith.constant 0 : i32
    %c0_i32_1 = arith.constant 0 : i32
    return %c0_i32, %c0_i32_0 : i32, i32
  }
  func.func @transform_4(%arg0: i32) -> (i32, i32) {
    %c0_i32 = arith.constant 0 : i32
    %c0_i32_0 = arith.constant 0 : i32
    %c0_i32_1 = arith.constant 0 : i32
    return %c0_i32, %c0_i32_0 : i32, i32
  }
  func.func @transform_5(%arg0: i32) -> (i32, i32) {
    %c0_i32 = arith.constant 0 : i32
    %c0_i32_0 = arith.constant 0 : i32
    %c0_i32_1 = arith.constant 0 : i32
    return %c0_i32, %c0_i32_0 : i32, i32
  }
  func.func @transform_6(%arg0: i32) -> (i32, i32) {
    %c0_i32 = arith.constant 0 : i32
    %c0_i32_0 = arith.constant 0 : i32
    %c0_i32_1 = arith.constant 0 : i32
    return %c0_i32, %c0_i32_0 : i32, i32
  }
  func.func @transform_7(%arg0: i32) -> (i32, i32) {
    %c0_i32 = arith.constant 0 : i32
    %c0_i32_0 = arith.constant 0 : i32
    return %arg0, %c0_i32 : i32, i32
  }
}

</mosaic_0001>

<llo_original>
// kernel: tpu_custom_call.1
$region0: #{tpu_custom_call.1}
  #allocation0 [shape = 'u32[]', space=smem, size = 0x4, offset = 0x4, fixed_abs, tag = 'smem constant byte address 0x4 - core index']
  #allocation1 [shape = 'u32[72,128]{1,0:T(1,128)}', space=vmem, size = 0x9000, scoped, tag = 'internal scratch']
  %s0 = inlined_call_operand.vmem [shape: f32[256,16], index: 0, kind: input, shape index: {}]
  %s1 = inlined_call_operand.vmem [shape: f32[16,64], index: 1, kind: input, shape index: {}]
  %s2 = inlined_call_operand.vmem [shape: f32[1,64], index: 2, kind: input, shape index: {}]
  %s3 = inlined_call_operand.vmem [shape: f32[64,64], index: 3, kind: input, shape index: {}]
  %s4 = inlined_call_operand.vmem [shape: f32[1,64], index: 4, kind: input, shape index: {}]
  %s5 = inlined_call_operand.vmem [shape: f32[64,128], index: 5, kind: input, shape index: {}]
  %s6 = inlined_call_operand.vmem [shape: f32[1,128], index: 6, kind: input, shape index: {}]
  %s7 = inlined_call_operand.hbm [shape: f32[256,128], index: 7, kind: output, shape index: {}]
  %s8 = sld [smem:[#allocation0]]
  $region38: #{tpu_custom_call.1} parent=0
    _
  %s10 = ssub.s32 1, %s8
  %s11 = scalar_select 0, %s10, %s8
  $region1: #{tpu_custom_call.1} parent=0
    #allocation2 [shape = 'u8[131072]{0}', space=vmem, size = 0x20000, scoped, tag = 'output window, operand 0, single buffered']
    #allocation3 [shape = 's32[1]{0}', space=sflag, size = 0x4, scoped, tag = 'scoped memory for tpu_custom_call.1']
    %12 = vsyncpa [#allocation3], 0
    // Predicated region
    $region2: #{tpu_custom_call.1} parent=1 // pred_check
      _
    $region3: #{tpu_custom_call.1} parent=1 // pred_check_branch
      %14 = sbr.rel (0) target = $region5
    $region4: #{tpu_custom_call.1} parent=1 // pred_region
      _
    $region5: #{tpu_custom_call.1} parent=1 // pred_fallthru
      _
    // Predicated region
    $region6: #{tpu_custom_call.1} parent=1 // pred_check
      _
    $region7: #{tpu_custom_call.1} parent=1 // pred_check_branch
      %16 = sbr.rel (0) target = $region9
    $region8: #{tpu_custom_call.1} parent=1 // pred_region
      _
    $region9: #{tpu_custom_call.1} parent=1 // pred_fallthru
      _
    // Predicated region
    $region10: #{tpu_custom_call.1} parent=1 // pred_check
      _
    $region11: #{tpu_custom_call.1} parent=1 // pred_check_branch
      %18 = sbr.rel (0) target = $region13
    $region12: #{tpu_custom_call.1} parent=1 // pred_region
      _
    $region13: #{tpu_custom_call.1} parent=1 // pred_fallthru
      _
    // Predicated region
    $region14: #{tpu_custom_call.1} parent=1 // pred_check
      _
    $region15: #{tpu_custom_call.1} parent=1 // pred_check_branch
      %20 = sbr.rel (0) target = $region17
    $region16: #{tpu_custom_call.1} parent=1 // pred_region
      _
    $region17: #{tpu_custom_call.1} parent=1 // pred_fallthru
      _
    // Predicated region
    $region18: #{tpu_custom_call.1} parent=1 // pred_check
      _
    $region19: #{tpu_custom_call.1} parent=1 // pred_check_branch
      %22 = sbr.rel (0) target = $region21
    $region20: #{tpu_custom_call.1} parent=1 // pred_region
      _
    $region21: #{tpu_custom_call.1} parent=1 // pred_fallthru
      _
    // Predicated region
    $region22: #{tpu_custom_call.1} parent=1 // pred_check
      _
    $region23: #{tpu_custom_call.1} parent=1 // pred_check_branch
      %24 = sbr.rel (0) target = $region25
    $region24: #{tpu_custom_call.1} parent=1 // pred_region
      _
    $region25: #{tpu_custom_call.1} parent=1 // pred_fallthru
      _
    // Predicated region
    $region26: #{tpu_custom_call.1} parent=1 // pred_check
      _
    $region27: #{tpu_custom_call.1} parent=1 // pred_check_branch
      %26 = sbr.rel (0) target = $region29
    $region28: #{tpu_custom_call.1} parent=1 // pred_region
      _
    $region29: #{tpu_custom_call.1} parent=1 // pred_fallthru
      _
    %v27 = vld [vmem:[%s0] sm:$0xff]
    %v28 = vld [vmem:[%s0 + $0x8] sm:$0xff]
    %v29 = vld [vmem:[%s0 + $0x10] sm:$0xff]
    %v30 = vld [vmem:[%s0 + $0x18] sm:$0xff]
    %v31 = vld [vmem:[%s0 + $0x20] sm:$0xff]
    %v32 = vld [vmem:[%s0 + $0x28] sm:$0xff]
    %v33 = vld [vmem:[%s0 + $0x30] sm:$0xff]
    %v34 = vld [vmem:[%s0 + $0x38] sm:$0xff]
    %v35 = vld [vmem:[%s0 + $0x40] sm:$0xff]
    %v36 = vld [vmem:[%s0 + $0x48] sm:$0xff]
    %v37 = vld [vmem:[%s0 + $0x50] sm:$0xff]
    %v38 = vld [vmem:[%s0 + $0x58] sm:$0xff]
    %v39 = vld [vmem:[%s0 + $0x60] sm:$0xff]
    %v40 = vld [vmem:[%s0 + $0x68] sm:$0xff]
    %v41 = vld [vmem:[%s0 + $0x70] sm:$0xff]
    %v42 = vld [vmem:[%s0 + $0x78] sm:$0xff]
    %v43 = vld [vmem:[%s0 + $0x80] sm:$0xff]
    %v44 = vld [vmem:[%s0 + $0x88] sm:$0xff]
    %v45 = vld [vmem:[%s0 + $0x90] sm:$0xff]
    %v46 = vld [vmem:[%s0 + $0x98] sm:$0xff]
    %v47 = vld [vmem:[%s0 + $0xa0] sm:$0xff]
    %v48 = vld [vmem:[%s0 + $0xa8] sm:$0xff]
    %v49 = vld [vmem:[%s0 + $0xb0] sm:$0xff]
    %v50 = vld [vmem:[%s0 + $0xb8] sm:$0xff]
    %v51 = vld [vmem:[%s0 + $0xc0] sm:$0xff]
    %v52 = vld [vmem:[%s0 + $0xc8] sm:$0xff]
    %v53 = vld [vmem:[%s0 + $0xd0] sm:$0xff]
    %v54 = vld [vmem:[%s0 + $0xd8] sm:$0xff]
    %v55 = vld [vmem:[%s0 + $0xe0] sm:$0xff]
    %v56 = vld [vmem:[%s0 + $0xe8] sm:$0xff]
    %v57 = vld [vmem:[%s0 + $0xf0] sm:$0xff]
    %v58 = vld [vmem:[%s0 + $0xf8] sm:$0xff]
    %v59 = vld [vmem:[%s1] sm:$0xff]
    %v60 = vld [vmem:[%s1 + $0x8] sm:$0xff]
    %v61 = vld [vmem:[%s2] sm:$0x1]
    %v63 = vperm.slane %v61, 0
    %vm65 = vcmask 130048
    %v67 = vsel %vm65, %v27, 0
    %v70 = vsel %vm65, %v28, 0
    %v73 = vsel %vm65, %v29, 0
    %v76 = vsel %vm65, %v30, 0
    %v79 = vsel %vm65, %v31, 0
    %v82 = vsel %vm65, %v32, 0
    %v85 = vsel %vm65, %v33, 0
    %v88 = vsel %vm65, %v34, 0
    %v91 = vsel %vm65, %v35, 0
    %v94 = vsel %vm65, %v36, 0
    %v97 = vsel %vm65, %v37, 0
    %v100 = vsel %vm65, %v38, 0
    %v103 = vsel %vm65, %v39, 0
    %v106 = vsel %vm65, %v40, 0
    %v109 = vsel %vm65, %v41, 0
    %v112 = vsel %vm65, %v42, 0
    %v115 = vsel %vm65, %v43, 0
    %v118 = vsel %vm65, %v44, 0
    %v121 = vsel %vm65, %v45, 0
    %v124 = vsel %vm65, %v46, 0
    %v127 = vsel %vm65, %v47, 0
    %v130 = vsel %vm65, %v48, 0
    %v133 = vsel %vm65, %v49, 0
    %v136 = vsel %vm65, %v50, 0
    %v139 = vsel %vm65, %v51, 0
    %v142 = vsel %vm65, %v52, 0
    %v145 = vsel %vm65, %v53, 0
    %v148 = vsel %vm65, %v54, 0
    %v151 = vsel %vm65, %v55, 0
    %v154 = vsel %vm65, %v56, 0
    %v157 = vsel %vm65, %v57, 0
    %v160 = vsel %vm65, %v58, 0
    %162 = vmatpush.msra.mxu0 0.0
    %163 = vmatpush.msra.mxu0 0.0
    %164 = vmatpush.msra.mxu0 0.0
    %165 = vmatpush.msra.mxu0 0.0
    %166 = vmatpush.msra.mxu0 0.0
    %167 = vmatpush.msra.mxu0 0.0
    %168 = vmatpush.msra.mxu0 0.0
    %169 = vmatpush.msra.mxu0 0.0
    %170 = vmatpush.msra.mxu0 0.0
    %171 = vmatpush.msra.mxu0 0.0
    %172 = vmatpush.msra.mxu0 0.0
    %173 = vmatpush.msra.mxu0 0.0
    %174 = vmatpush.msra.mxu0 0.0
    %175 = vmatpush.msra.mxu0 0.0
    %176 = vmatpush.msra.mxu0 %v60
    %177 = vmatpush.msra.mxu0 %v59
    %178 = vmatmul.f32.gmra.mxu0 %v67
    %v179 = vpop.f32.mrf.mxu0
    %v180 = vadd.f32 %v63, %v179
    %181 = vmatmul.f32.gmra.mxu0 %v70
    %v182 = vpop.f32.mrf.mxu0
    %v183 = vadd.f32 %v63, %v182
    %184 = vmatmul.f32.gmra.mxu0 %v73
    %v185 = vpop.f32.mrf.mxu0
    %v186 = vadd.f32 %v63, %v185
    %187 = vmatmul.f32.gmra.mxu0 %v76
    %v188 = vpop.f32.mrf.mxu0
    %v189 = vadd.f32 %v63, %v188
    %190 = vmatmul.f32.gmra.mxu0 %v79
    %v191 = vpop.f32.mrf.mxu0
    %v192 = vadd.f32 %v63, %v191
    %193 = vmatmul.f32.gmra.mxu0 %v82
    %v194 = vpop.f32.mrf.mxu0
    %v195 = vadd.f32 %v63, %v194
    %196 = vmatmul.f32.gmra.mxu0 %v85
    %v197 = vpop.f32.mrf.mxu0
    %v198 = vadd.f32 %v63, %v197
    %199 = vmatmul.f32.gmra.mxu0 %v88
    %v200 = vpop.f32.mrf.mxu0
    %v201 = vadd.f32 %v63, %v200
    %202 = vmatmul.f32.gmra.mxu0 %v91
    %v203 = vpop.f32.mrf.mxu0
    %v204 = vadd.f32 %v63, %v203
    %205 = vmatmul.f32.gmra.mxu0 %v94
    %v206 = vpop.f32.mrf.mxu0
    %v207 = vadd.f32 %v63, %v206
    %208 = vmatmul.f32.gmra.mxu0 %v97
    %v209 = vpop.f32.mrf.mxu0
    %v210 = vadd.f32 %v63, %v209
    %211 = vmatmul.f32.gmra.mxu0 %v100
    %v212 = vpop.f32.mrf.mxu0
    %v213 = vadd.f32 %v63, %v212
    %214 = vmatmul.f32.gmra.mxu0 %v103
    %v215 = vpop.f32.mrf.mxu0
    %v216 = vadd.f32 %v63, %v215
    %217 = vmatmul.f32.gmra.mxu0 %v106
    %v218 = vpop.f32.mrf.mxu0
    %v219 = vadd.f32 %v63, %v218
    %220 = vmatmul.f32.gmra.mxu0 %v109
    %v221 = vpop.f32.mrf.mxu0
    %v222 = vadd.f32 %v63, %v221
    %223 = vmatmul.f32.gmra.mxu0 %v112
    %v224 = vpop.f32.mrf.mxu0
    %v225 = vadd.f32 %v63, %v224
    %226 = vmatmul.f32.gmra.mxu0 %v115
    %v227 = vpop.f32.mrf.mxu0
    %v228 = vadd.f32 %v63, %v227
    %229 = vmatmul.f32.gmra.mxu0 %v118
    %v230 = vpop.f32.mrf.mxu0
    %v231 = vadd.f32 %v63, %v230
    %232 = vmatmul.f32.gmra.mxu0 %v121
    %v233 = vpop.f32.mrf.mxu0
    %v234 = vadd.f32 %v63, %v233
    %235 = vmatmul.f32.gmra.mxu0 %v124
    %v236 = vpop.f32.mrf.mxu0
    %v237 = vadd.f32 %v63, %v236
    %238 = vmatmul.f32.gmra.mxu0 %v127
    %v239 = vpop.f32.mrf.mxu0
    %v240 = vadd.f32 %v63, %v239
    %241 = vmatmul.f32.gmra.mxu0 %v130
    %v242 = vpop.f32.mrf.mxu0
    %v243 = vadd.f32 %v63, %v242
    %244 = vmatmul.f32.gmra.mxu0 %v133
    %v245 = vpop.f32.mrf.mxu0
    %v246 = vadd.f32 %v63, %v245
    %247 = vmatmul.f32.gmra.mxu0 %v136
    %v248 = vpop.f32.mrf.mxu0
    %v249 = vadd.f32 %v63, %v248
    %250 = vmatmul.f32.gmra.mxu0 %v139
    %v251 = vpop.f32.mrf.mxu0
    %v252 = vadd.f32 %v63, %v251
    %253 = vmatmul.f32.gmra.mxu0 %v142
    %v254 = vpop.f32.mrf.mxu0
    %v255 = vadd.f32 %v63, %v254
    %256 = vmatmul.f32.gmra.mxu0 %v145
    %v257 = vpop.f32.mrf.mxu0
    %v258 = vadd.f32 %v63, %v257
    %259 = vmatmul.f32.gmra.mxu0 %v148
    %v260 = vpop.f32.mrf.mxu0
    %v261 = vadd.f32 %v63, %v260
    %262 = vmatmul.f32.gmra.mxu0 %v151
    %v263 = vpop.f32.mrf.mxu0
    %v264 = vadd.f32 %v63, %v263
    %265 = vmatmul.f32.gmra.mxu0 %v154
    %v266 = vpop.f32.mrf.mxu0
    %v267 = vadd.f32 %v63, %v266
    %268 = vmatmul.f32.gmra.mxu0 %v157
    %v269 = vpop.f32.mrf.mxu0
    %v270 = vadd.f32 %v63, %v269
    %271 = vmatmul.f32.gmra.mxu0 %v160
    %v272 = vpop.f32.mrf.mxu0
    %v273 = vadd.f32 %v63, %v272
    %274 = vdwg.mxu0
    %v275 = vtanh.pop %v180
    %v276 = vtanh.pop %v183
    %v277 = vtanh.pop %v186
    %v278 = vtanh.pop %v189
    %v279 = vtanh.pop %v192
    %v280 = vtanh.pop %v195
    %v281 = vtanh.pop %v198
    %v282 = vtanh.pop %v201
    %v283 = vtanh.pop %v204
    %v284 = vtanh.pop %v207
    %v285 = vtanh.pop %v210
    %v286 = vtanh.pop %v213
    %v287 = vtanh.pop %v216
    %v288 = vtanh.pop %v219
    %v289 = vtanh.pop %v222
    %v290 = vtanh.pop %v225
    %v291 = vtanh.pop %v228
    %v292 = vtanh.pop %v231
    %v293 = vtanh.pop %v234
    %v294 = vtanh.pop %v237
    %v295 = vtanh.pop %v240
    %v296 = vtanh.pop %v243
    %v297 = vtanh.pop %v246
    %v298 = vtanh.pop %v249
    %v299 = vtanh.pop %v252
    %v300 = vtanh.pop %v255
    %v301 = vtanh.pop %v258
    %v302 = vtanh.pop %v261
    %v303 = vtanh.pop %v264
    %v304 = vtanh.pop %v267
    %v305 = vtanh.pop %v270
    %v306 = vtanh.pop %v273
    %v307 = vld [vmem:[%s3] sm:$0xff]
    %v308 = vld [vmem:[%s3 + $0x8] sm:$0xff]
    %v309 = vld [vmem:[%s3 + $0x10] sm:$0xff]
    %v310 = vld [vmem:[%s3 + $0x18] sm:$0xff]
    %v311 = vld [vmem:[%s3 + $0x20] sm:$0xff]
    %v312 = vld [vmem:[%s3 + $0x28] sm:$0xff]
    %v313 = vld [vmem:[%s3 + $0x30] sm:$0xff]
    %v314 = vld [vmem:[%s3 + $0x38] sm:$0xff]
    %v315 = vld [vmem:[%s4] sm:$0x1]
    %v317 = vperm.slane %v315, 0
    %vm319 = vcmask 523264
    %v321 = vsel %vm319, %v275, 0
    %v324 = vsel %vm319, %v276, 0
    %v327 = vsel %vm319, %v277, 0
    %v330 = vsel %vm319, %v278, 0
    %v333 = vsel %vm319, %v279, 0
    %v336 = vsel %vm319, %v280, 0
    %v339 = vsel %vm319, %v281, 0
    %v342 = vsel %vm319, %v282, 0
    %v345 = vsel %vm319, %v283, 0
    %v348 = vsel %vm319, %v284, 0
    %v351 = vsel %vm319, %v285, 0
    %v354 = vsel %vm319, %v286, 0
    %v357 = vsel %vm319, %v287, 0
    %v360 = vsel %vm319, %v288, 0
    %v363 = vsel %vm319, %v289, 0
    %v366 = vsel %vm319, %v290, 0
    %v369 = vsel %vm319, %v291, 0
    %v372 = vsel %vm319, %v292, 0
    %v375 = vsel %vm319, %v293, 0
    %v378 = vsel %vm319, %v294, 0
    %v381 = vsel %vm319, %v295, 0
    %v384 = vsel %vm319, %v296, 0
    %v387 = vsel %vm319, %v297, 0
    %v390 = vsel %vm319, %v298, 0
    %v393 = vsel %vm319, %v299, 0
    %v396 = vsel %vm319, %v300, 0
    %v399 = vsel %vm319, %v301, 0
    %v402 = vsel %vm319, %v302, 0
    %v405 = vsel %vm319, %v303, 0
    %v408 = vsel %vm319, %v304, 0
    %v411 = vsel %vm319, %v305, 0
    %v414 = vsel %vm319, %v306, 0
    %416 = vmatpush.msra.mxu0 0.0
    %417 = vmatpush.msra.mxu0 0.0
    %418 = vmatpush.msra.mxu0 0.0
    %419 = vmatpush.msra.mxu0 0.0
    %420 = vmatpush.msra.mxu0 0.0
    %421 = vmatpush.msra.mxu0 0.0
    %422 = vmatpush.msra.mxu0 0.0
    %423 = vmatpush.msra.mxu0 0.0
    %424 = vmatpush.msra.mxu0 %v314
    %425 = vmatpush.msra.mxu0 %v313
    %426 = vmatpush.msra.mxu0 %v312
    %427 = vmatpush.msra.mxu0 %v311
    %428 = vmatpush.msra.mxu0 %v310
    %429 = vmatpush.msra.mxu0 %v309
    %430 = vmatpush.msra.mxu0 %v308
    %431 = vmatpush.msra.mxu0 %v307
    %432 = vmatmul.f32.gmra.mxu0 %v321
    %v433 = vpop.f32.mrf.mxu0
    %v434 = vadd.f32 %v317, %v433
    %435 = vmatmul.f32.gmra.mxu0 %v324
    %v436 = vpop.f32.mrf.mxu0
    %v437 = vadd.f32 %v317, %v436
    %438 = vmatmul.f32.gmra.mxu0 %v327
    %v439 = vpop.f32.mrf.mxu0
    %v440 = vadd.f32 %v317, %v439
    %441 = vmatmul.f32.gmra.mxu0 %v330
    %v442 = vpop.f32.mrf.mxu0
    %v443 = vadd.f32 %v317, %v442
    %444 = vmatmul.f32.gmra.mxu0 %v333
    %v445 = vpop.f32.mrf.mxu0
    %v446 = vadd.f32 %v317, %v445
    %447 = vmatmul.f32.gmra.mxu0 %v336
    %v448 = vpop.f32.mrf.mxu0
    %v449 = vadd.f32 %v317, %v448
    %450 = vmatmul.f32.gmra.mxu0 %v339
    %v451 = vpop.f32.mrf.mxu0
    %v452 = vadd.f32 %v317, %v451
    %453 = vmatmul.f32.gmra.mxu0 %v342
    %v454 = vpop.f32.mrf.mxu0
    %v455 = vadd.f32 %v317, %v454
    %456 = vmatmul.f32.gmra.mxu0 %v345
    %v457 = vpop.f32.mrf.mxu0
    %v458 = vadd.f32 %v317, %v457
    %459 = vmatmul.f32.gmra.mxu0 %v348
    %v460 = vpop.f32.mrf.mxu0
    %v461 = vadd.f32 %v317, %v460
    %462 = vmatmul.f32.gmra.mxu0 %v351
    %v463 = vpop.f32.mrf.mxu0
    %v464 = vadd.f32 %v317, %v463
    %465 = vmatmul.f32.gmra.mxu0 %v354
    %v466 = vpop.f32.mrf.mxu0
    %v467 = vadd.f32 %v317, %v466
    %468 = vmatmul.f32.gmra.mxu0 %v357
    %v469 = vpop.f32.mrf.mxu0
    %v470 = vadd.f32 %v317, %v469
    %471 = vmatmul.f32.gmra.mxu0 %v360
    %v472 = vpop.f32.mrf.mxu0
    %v473 = vadd.f32 %v317, %v472
    %474 = vmatmul.f32.gmra.mxu0 %v363
    %v475 = vpop.f32.mrf.mxu0
    %v476 = vadd.f32 %v317, %v475
    %477 = vmatmul.f32.gmra.mxu0 %v366
    %v478 = vpop.f32.mrf.mxu0
    %v479 = vadd.f32 %v317, %v478
    %480 = vmatmul.f32.gmra.mxu0 %v369
    %v481 = vpop.f32.mrf.mxu0
    %v482 = vadd.f32 %v317, %v481
    %483 = vmatmul.f32.gmra.mxu0 %v372
    %v484 = vpop.f32.mrf.mxu0
    %v485 = vadd.f32 %v317, %v484
    %486 = vmatmul.f32.gmra.mxu0 %v375
    %v487 = vpop.f32.mrf.mxu0
    %v488 = vadd.f32 %v317, %v487
    %489 = vmatmul.f32.gmra.mxu0 %v378
    %v490 = vpop.f32.mrf.mxu0
    %v491 = vadd.f32 %v317, %v490
    %492 = vmatmul.f32.gmra.mxu0 %v381
    %v493 = vpop.f32.mrf.mxu0
    %v494 = vadd.f32 %v317, %v493
    %495 = vmatmul.f32.gmra.mxu0 %v384
    %v496 = vpop.f32.mrf.mxu0
    %v497 = vadd.f32 %v317, %v496
    %498 = vmatmul.f32.gmra.mxu0 %v387
    %v499 = vpop.f32.mrf.mxu0
    %v500 = vadd.f32 %v317, %v499
    %501 = vmatmul.f32.gmra.mxu0 %v390
    %v502 = vpop.f32.mrf.mxu0
    %v503 = vadd.f32 %v317, %v502
    %504 = vmatmul.f32.gmra.mxu0 %v393
    %v505 = vpop.f32.mrf.mxu0
    %v506 = vadd.f32 %v317, %v505
    %507 = vmatmul.f32.gmra.mxu0 %v396
    %v508 = vpop.f32.mrf.mxu0
    %v509 = vadd.f32 %v317, %v508
    %510 = vmatmul.f32.gmra.mxu0 %v399
    %v511 = vpop.f32.mrf.mxu0
    %v512 = vadd.f32 %v317, %v511
    %513 = vmatmul.f32.gmra.mxu0 %v402
    %v514 = vpop.f32.mrf.mxu0
    %v515 = vadd.f32 %v317, %v514
    %516 = vmatmul.f32.gmra.mxu0 %v405
    %v517 = vpop.f32.mrf.mxu0
    %v518 = vadd.f32 %v317, %v517
    %519 = vmatmul.f32.gmra.mxu0 %v408
    %v520 = vpop.f32.mrf.mxu0
    %v521 = vadd.f32 %v317, %v520
    %522 = vmatmul.f32.gmra.mxu0 %v411
    %v523 = vpop.f32.mrf.mxu0
    %v524 = vadd.f32 %v317, %v523
    %525 = vmatmul.f32.gmra.mxu0 %v414
    %v526 = vpop.f32.mrf.mxu0
    %v527 = vadd.f32 %v317, %v526
    %528 = vdwg.mxu0
    %v529 = vtanh.pop %v434
    %v530 = vtanh.pop %v437
    %v531 = vtanh.pop %v440
    %v532 = vtanh.pop %v443
    %v533 = vtanh.pop %v446
    %v534 = vtanh.pop %v449
    %v535 = vtanh.pop %v452
    %v536 = vtanh.pop %v455
    %v537 = vtanh.pop %v458
    %v538 = vtanh.pop %v461
    %v539 = vtanh.pop %v464
    %v540 = vtanh.pop %v467
    %v541 = vtanh.pop %v470
    %v542 = vtanh.pop %v473
    %v543 = vtanh.pop %v476
    %v544 = vtanh.pop %v479
    %v545 = vtanh.pop %v482
    %v546 = vtanh.pop %v485
    %v547 = vtanh.pop %v488
    %v548 = vtanh.pop %v491
    %v549 = vtanh.pop %v494
    %v550 = vtanh.pop %v497
    %v551 = vtanh.pop %v500
    %v552 = vtanh.pop %v503
    %v553 = vtanh.pop %v506
    %v554 = vtanh.pop %v509
    %v555 = vtanh.pop %v512
    %v556 = vtanh.pop %v515
    %v557 = vtanh.pop %v518
    %v558 = vtanh.pop %v521
    %v559 = vtanh.pop %v524
    %v560 = vtanh.pop %v527
    %v561 = vld [vmem:[%s5] sm:$0xff]
    %v562 = vld [vmem:[%s5 + $0x8] sm:$0xff]
    %v563 = vld [vmem:[%s5 + $0x10] sm:$0xff]
    %v564 = vld [vmem:[%s5 + $0x18] sm:$0xff]
    %v565 = vld [vmem:[%s5 + $0x20] sm:$0xff]
    %v566 = vld [vmem:[%s5 + $0x28] sm:$0xff]
    %v567 = vld [vmem:[%s5 + $0x30] sm:$0xff]
    %v568 = vld [vmem:[%s5 + $0x38] sm:$0xff]
    %v569 = vld [vmem:[%s6] sm:$0x1]
    %v571 = vperm.slane %v569, 0
    %v574 = vsel %vm319, %v529, 0
    %v577 = vsel %vm319, %v530, 0
    %v580 = vsel %vm319, %v531, 0
    %v583 = vsel %vm319, %v532, 0
    %v586 = vsel %vm319, %v533, 0
    %v589 = vsel %vm319, %v534, 0
    %v592 = vsel %vm319, %v535, 0
    %v595 = vsel %vm319, %v536, 0
    %v598 = vsel %vm319, %v537, 0
    %v601 = vsel %vm319, %v538, 0
    %v604 = vsel %vm319, %v539, 0
    %v607 = vsel %vm319, %v540, 0
    %v610 = vsel %vm319, %v541, 0
    %v613 = vsel %vm319, %v542, 0
    %v616 = vsel %vm319, %v543, 0
    %v619 = vsel %vm319, %v544, 0
    %v622 = vsel %vm319, %v545, 0
    %v625 = vsel %vm319, %v546, 0
    %v628 = vsel %vm319, %v547, 0
    %v631 = vsel %vm319, %v548, 0
    %v634 = vsel %vm319, %v549, 0
    %v637 = vsel %vm319, %v550, 0
    %v640 = vsel %vm319, %v551, 0
    %v643 = vsel %vm319, %v552, 0
    %v646 = vsel %vm319, %v553, 0
    %v649 = vsel %vm319, %v554, 0
    %v652 = vsel %vm319, %v555, 0
    %v655 = vsel %vm319, %v556, 0
    %v658 = vsel %vm319, %v557, 0
    %v661 = vsel %vm319, %v558, 0
    %v664 = vsel %vm319, %v559, 0
    %v667 = vsel %vm319, %v560, 0
    %669 = vmatpush.msra.mxu0 0.0
    %670 = vmatpush.msra.mxu0 0.0
    %671 = vmatpush.msra.mxu0 0.0
    %672 = vmatpush.msra.mxu0 0.0
    %673 = vmatpush.msra.mxu0 0.0
    %674 = vmatpush.msra.mxu0 0.0
    %675 = vmatpush.msra.mxu0 0.0
    %676 = vmatpush.msra.mxu0 0.0
    %677 = vmatpush.msra.mxu0 %v568
    %678 = vmatpush.msra.mxu0 %v567
    %679 = vmatpush.msra.mxu0 %v566
    %680 = vmatpush.msra.mxu0 %v565
    %681 = vmatpush.msra.mxu0 %v564
    %682 = vmatpush.msra.mxu0 %v563
    %683 = vmatpush.msra.mxu0 %v562
    %684 = vmatpush.msra.mxu0 %v561
    %685 = vmatmul.f32.gmra.mxu0 %v574
    %v686 = vpop.f32.mrf.mxu0
    %v687 = vadd.f32 %v571, %v686
    %688 = vmatmul.f32.gmra.mxu0 %v577
    %v689 = vpop.f32.mrf.mxu0
    %v690 = vadd.f32 %v571, %v689
    %691 = vmatmul.f32.gmra.mxu0 %v580
    %v692 = vpop.f32.mrf.mxu0
    %v693 = vadd.f32 %v571, %v692
    %694 = vmatmul.f32.gmra.mxu0 %v583
    %v695 = vpop.f32.mrf.mxu0
    %v696 = vadd.f32 %v571, %v695
    %697 = vmatmul.f32.gmra.mxu0 %v586
    %v698 = vpop.f32.mrf.mxu0
    %v699 = vadd.f32 %v571, %v698
    %700 = vmatmul.f32.gmra.mxu0 %v589
    %v701 = vpop.f32.mrf.mxu0
    %v702 = vadd.f32 %v571, %v701
    %703 = vmatmul.f32.gmra.mxu0 %v592
    %v704 = vpop.f32.mrf.mxu0
    %v705 = vadd.f32 %v571, %v704
    %706 = vmatmul.f32.gmra.mxu0 %v595
    %v707 = vpop.f32.mrf.mxu0
    %v708 = vadd.f32 %v571, %v707
    %709 = vmatmul.f32.gmra.mxu0 %v598
    %v710 = vpop.f32.mrf.mxu0
    %v711 = vadd.f32 %v571, %v710
    %712 = vmatmul.f32.gmra.mxu0 %v601
    %v713 = vpop.f32.mrf.mxu0
    %v714 = vadd.f32 %v571, %v713
    %715 = vmatmul.f32.gmra.mxu0 %v604
    %v716 = vpop.f32.mrf.mxu0
    %v717 = vadd.f32 %v571, %v716
    %718 = vmatmul.f32.gmra.mxu0 %v607
    %v719 = vpop.f32.mrf.mxu0
    %v720 = vadd.f32 %v571, %v719
    %721 = vmatmul.f32.gmra.mxu0 %v610
    %v722 = vpop.f32.mrf.mxu0
    %v723 = vadd.f32 %v571, %v722
    %724 = vmatmul.f32.gmra.mxu0 %v613
    %v725 = vpop.f32.mrf.mxu0
    %v726 = vadd.f32 %v571, %v725
    %727 = vmatmul.f32.gmra.mxu0 %v616
    %v728 = vpop.f32.mrf.mxu0
    %v729 = vadd.f32 %v571, %v728
    %730 = vmatmul.f32.gmra.mxu0 %v619
    %v731 = vpop.f32.mrf.mxu0
    %v732 = vadd.f32 %v571, %v731
    %733 = vmatmul.f32.gmra.mxu0 %v622
    %v734 = vpop.f32.mrf.mxu0
    %v735 = vadd.f32 %v571, %v734
    %736 = vmatmul.f32.gmra.mxu0 %v625
    %v737 = vpop.f32.mrf.mxu0
    %v738 = vadd.f32 %v571, %v737
    %739 = vmatmul.f32.gmra.mxu0 %v628
    %v740 = vpop.f32.mrf.mxu0
    %v741 = vadd.f32 %v571, %v740
    %742 = vmatmul.f32.gmra.mxu0 %v631
    %v743 = vpop.f32.mrf.mxu0
    %v744 = vadd.f32 %v571, %v743
    %745 = vmatmul.f32.gmra.mxu0 %v634
    %v746 = vpop.f32.mrf.mxu0
    %v747 = vadd.f32 %v571, %v746
    %748 = vmatmul.f32.gmra.mxu0 %v637
    %v749 = vpop.f32.mrf.mxu0
    %v750 = vadd.f32 %v571, %v749
    %751 = vmatmul.f32.gmra.mxu0 %v640
    %v752 = vpop.f32.mrf.mxu0
    %v753 = vadd.f32 %v571, %v752
    %754 = vmatmul.f32.gmra.mxu0 %v643
    %v755 = vpop.f32.mrf.mxu0
    %v756 = vadd.f32 %v571, %v755
    %757 = vmatmul.f32.gmra.mxu0 %v646
    %v758 = vpop.f32.mrf.mxu0
    %v759 = vadd.f32 %v571, %v758
    %760 = vmatmul.f32.gmra.mxu0 %v649
    %v761 = vpop.f32.mrf.mxu0
    %v762 = vadd.f32 %v571, %v761
    %763 = vmatmul.f32.gmra.mxu0 %v652
    %v764 = vpop.f32.mrf.mxu0
    %v765 = vadd.f32 %v571, %v764
    %766 = vmatmul.f32.gmra.mxu0 %v655
    %v767 = vpop.f32.mrf.mxu0
    %v768 = vadd.f32 %v571, %v767
    %769 = vmatmul.f32.gmra.mxu0 %v658
    %v770 = vpop.f32.mrf.mxu0
    %v771 = vadd.f32 %v571, %v770
    %772 = vmatmul.f32.gmra.mxu0 %v661
    %v773 = vpop.f32.mrf.mxu0
    %v774 = vadd.f32 %v571, %v773
    %775 = vmatmul.f32.gmra.mxu0 %v664
    %v776 = vpop.f32.mrf.mxu0
    %v777 = vadd.f32 %v571, %v776
    %778 = vmatmul.f32.gmra.mxu0 %v667
    %v779 = vpop.f32.mrf.mxu0
    %v780 = vadd.f32 %v571, %v779
    %781 = vdwg.mxu0
    %782 = vst [vmem:[#allocation2] sm:$0xff] %v687
    %783 = vst [vmem:[#allocation2 + $0x8] sm:$0xff] %v690
    %784 = vst [vmem:[#allocation2 + $0x10] sm:$0xff] %v693
    %785 = vst [vmem:[#allocation2 + $0x18] sm:$0xff] %v696
    %786 = vst [vmem:[#allocation2 + $0x20] sm:$0xff] %v699
    %787 = vst [vmem:[#allocation2 + $0x28] sm:$0xff] %v702
    %788 = vst [vmem:[#allocation2 + $0x30] sm:$0xff] %v705
    %789 = vst [vmem:[#allocation2 + $0x38] sm:$0xff] %v708
    %790 = vst [vmem:[#allocation2 + $0x40] sm:$0xff] %v711
    %791 = vst [vmem:[#allocation2 + $0x48] sm:$0xff] %v714
    %792 = vst [vmem:[#allocation2 + $0x50] sm:$0xff] %v717
    %793 = vst [vmem:[#allocation2 + $0x58] sm:$0xff] %v720
    %794 = vst [vmem:[#allocation2 + $0x60] sm:$0xff] %v723
    %795 = vst [vmem:[#allocation2 + $0x68] sm:$0xff] %v726
    %796 = vst [vmem:[#allocation2 + $0x70] sm:$0xff] %v729
    %797 = vst [vmem:[#allocation2 + $0x78] sm:$0xff] %v732
    %798 = vst [vmem:[#allocation2 + $0x80] sm:$0xff] %v735
    %799 = vst [vmem:[#allocation2 + $0x88] sm:$0xff] %v738
    %800 = vst [vmem:[#allocation2 + $0x90] sm:$0xff] %v741
    %801 = vst [vmem:[#allocation2 + $0x98] sm:$0xff] %v744
    %802 = vst [vmem:[#allocation2 + $0xa0] sm:$0xff] %v747
    %803 = vst [vmem:[#allocation2 + $0xa8] sm:$0xff] %v750
    %804 = vst [vmem:[#allocation2 + $0xb0] sm:$0xff] %v753
    %805 = vst [vmem:[#allocation2 + $0xb8] sm:$0xff] %v756
    %806 = vst [vmem:[#allocation2 + $0xc0] sm:$0xff] %v759
    %807 = vst [vmem:[#allocation2 + $0xc8] sm:$0xff] %v762
    %808 = vst [vmem:[#allocation2 + $0xd0] sm:$0xff] %v765
    %809 = vst [vmem:[#allocation2 + $0xd8] sm:$0xff] %v768
    %810 = vst [vmem:[#allocation2 + $0xe0] sm:$0xff] %v771
    %811 = vst [vmem:[#allocation2 + $0xe8] sm:$0xff] %v774
    %812 = vst [vmem:[#allocation2 + $0xf0] sm:$0xff] %v777
    %813 = vst [vmem:[#allocation2 + $0xf8] sm:$0xff] %v780
    // Predicated region
    $region30: #{tpu_custom_call.1} parent=1 // pred_check
      _
    $region31: #{tpu_custom_call.1} parent=1 // pred_check_branch
      %815 = sbr.rel (0) target = $region33
    $region32: #{tpu_custom_call.1} parent=1 // pred_region
      %817 = vsyncadd [#allocation3], 0
      %s818 = sshll.u32 [#allocation2], 4
      %s819 = int_to_ptr.vmem [resolvable:$true] %s818
      %s820 = sshll.u32 %s7, 4
      %s821 = int_to_ptr.hbm [resolvable:$true] %s820
      %826 = dma.vmem_to_hbm [thread:$0]  %s819, 4096, %s821, [#allocation3], 128, 128, 8
    $region33: #{tpu_custom_call.1} parent=1 // pred_fallthru
      _
    // Predicated region
    $region34: #{tpu_custom_call.1} parent=1 // pred_check
      _
    $region35: #{tpu_custom_call.1} parent=1 // pred_check_branch
      %828 = sbr.rel (0) target = $region37
    $region36: #{tpu_custom_call.1} parent=1 // pred_region
      %830 = dma.done [#allocation3], 4096
    $region37: #{tpu_custom_call.1} parent=1 // pred_fallthru
      _
    %831 = vsyncpa [#allocation3], 1

// kernel: tpu_custom_call.1
$region0: #{tpu_custom_call.1}
  #allocation0 [shape = 'u32[]', space=smem, size = 0x4, offset = 0x4, fixed_abs, tag = 'smem constant byte address 0x4 - core index']
  #allocation1 [shape = 'u32[72,128]{1,0:T(1,128)}', space=vmem, size = 0x9000, scoped, tag = 'internal scratch']
  %s0 = inlined_call_operand.vmem [shape: f32[256,16], index: 0, kind: input, shape index: {}]
  %s1 = inlined_call_operand.vmem [shape: f32[16,64], index: 1, kind: input, shape index: {}]
  %s2 = inlined_call_operand.vmem [shape: f32[1,64], index: 2, kind: input, shape index: {}]
  %s3 = inlined_call_operand.vmem [shape: f32[64,64], index: 3, kind: input, shape index: {}]
  %s4 = inlined_call_operand.vmem [shape: f32[1,64], index: 4, kind: input, shape index: {}]
  %s5 = inlined_call_operand.vmem [shape: f32[64,128], index: 5, kind: input, shape index: {}]
  %s6 = inlined_call_operand.vmem [shape: f32[1,128], index: 6, kind: input, shape index: {}]
  %s7 = inlined_call_operand.hbm [shape: f32[256,128], index: 7, kind: output, shape index: {}]
  %s8 = sld [smem:[#allocation0]]
  $region38: #{tpu_custom_call.1} parent=0
    _
  %s10 = ssub.s32 1, %s8
  %s11 = scalar_select 0, %s10, %s8
  $region1: #{tpu_custom_call.1} parent=0
    #allocation2 [shape = 'u8[131072]{0}', space=vmem, size = 0x20000, scoped, tag = 'output window, operand 0, single buffered']
    #allocation3 [shape = 's32[1]{0}', space=sflag, size = 0x4, scoped, tag = 'scoped memory for tpu_custom_call.1']
    %12 = vsyncpa [#allocation3], 0
    // Predicated region
    $region2: #{tpu_custom_call.1} parent=1 // pred_check
      _
    $region3: #{tpu_custom_call.1} parent=1 // pred_check_branch
      %14 = sbr.rel (0) target = $region5
    $region4: #{tpu_custom_call.1} parent=1 // pred_region
      _
    $region5: #{tpu_custom_call.1} parent=1 // pred_fallthru
      _
    // Predicated region
    $region6: #{tpu_custom_call.1} parent=1 // pred_check
      _
    $region7: #{tpu_custom_call.1} parent=1 // pred_check_branch
      %16 = sbr.rel (0) target = $region9
    $region8: #{tpu_custom_call.1} parent=1 // pred_region
      _
    $region9: #{tpu_custom_call.1} parent=1 // pred_fallthru
      _
    // Predicated region
    $region10: #{tpu_custom_call.1} parent=1 // pred_check
      _
    $region11: #{tpu_custom_call.1} parent=1 // pred_check_branch
      %18 = sbr.rel (0) target = $region13
    $region12: #{tpu_custom_call.1} parent=1 // pred_region
      _
    $region13: #{tpu_custom_call.1} parent=1 // pred_fallthru
      _
    // Predicated region
    $region14: #{tpu_custom_call.1} parent=1 // pred_check
      _
    $region15: #{tpu_custom_call.1} parent=1 // pred_check_branch
      %20 = sbr.rel (0) target = $region17
    $region16: #{tpu_custom_call.1} parent=1 // pred_region
      _
    $region17: #{tpu_custom_call.1} parent=1 // pred_fallthru
      _
    // Predicated region
    $region18: #{tpu_custom_call.1} parent=1 // pred_check
      _
    $region19: #{tpu_custom_call.1} parent=1 // pred_check_branch
      %22 = sbr.rel (0) target = $region21
    $region20: #{tpu_custom_call.1} parent=1 // pred_region
      _
    $region21: #{tpu_custom_call.1} parent=1 // pred_fallthru
      _
    // Predicated region
    $region22: #{tpu_custom_call.1} parent=1 // pred_check
      _
    $region23: #{tpu_custom_call.1} parent=1 // pred_check_branch
      %24 = sbr.rel (0) target = $region25
    $region24: #{tpu_custom_call.1} parent=1 // pred_region
      _
    $region25: #{tpu_custom_call.1} parent=1 // pred_fallthru
      _
    // Predicated region
    $region26: #{tpu_custom_call.1} parent=1 // pred_check
      _
    $region27: #{tpu_custom_call.1} parent=1 // pred_check_branch
      %26 = sbr.rel (0) target = $region29
    $region28: #{tpu_custom_call.1} parent=1 // pred_region
      _
    $region29: #{tpu_custom_call.1} parent=1 // pred_fallthru
      _
    %v27 = vld [vmem:[%s0] sm:$0xff]
    %v28 = vld [vmem:[%s0 + $0x8] sm:$0xff]
    %v29 = vld [vmem:[%s0 + $0x10] sm:$0xff]
    %v30 = vld [vmem:[%s0 + $0x18] sm:$0xff]
    %v31 = vld [vmem:[%s0 + $0x20] sm:$0xff]
    %v32 = vld [vmem:[%s0 + $0x28] sm:$0xff]
    %v33 = vld [vmem:[%s0 + $0x30] sm:$0xff]
    %v34 = vld [vmem:[%s0 + $0x38] sm:$0xff]
    %v35 = vld [vmem:[%s0 + $0x40] sm:$0xff]
    %v36 = vld [vmem:[%s0 + $0x48] sm:$0xff]
    %v37 = vld [vmem:[%s0 + $0x50] sm:$0xff]
    %v38 = vld [vmem:[%s0 + $0x58] sm:$0xff]
    %v39 = vld [vmem:[%s0 + $0x60] sm:$0xff]
    %v40 = vld [vmem:[%s0 + $0x68] sm:$0xff]
    %v41 = vld [vmem:[%s0 + $0x70] sm:$0xff]
    %v42 = vld [vmem:[%s0 + $0x78] sm:$0xff]
    %v43 = vld [vmem:[%s0 + $0x80] sm:$0xff]
    %v44 = vld [vmem:[%s0 + $0x88] sm:$0xff]
    %v45 = vld [vmem:[%s0 + $0x90] sm:$0xff]
    %v46 = vld [vmem:[%s0 + $0x98] sm:$0xff]
    %v47 = vld [vmem:[%s0 + $0xa0] sm:$0xff]
    %v48 = vld [vmem:[%s0 + $0xa8] sm:$0xff]
    %v49 = vld [vmem:[%s0 + $0xb0] sm:$0xff]
    %v50 = vld [vmem:[%s0 + $0xb8] sm:$0xff]
    %v51 = vld [vmem:[%s0 + $0xc0] sm:$0xff]
    %v52 = vld [vmem:[%s0 + $0xc8] sm:$0xff]
    %v53 = vld [vmem:[%s0 + $0xd0] sm:$0xff]
    %v54 = vld [vmem:[%s0 + $0xd8] sm:$0xff]
    %v55 = vld [vmem:[%s0 + $0xe0] sm:$0xff]
    %v56 = vld [vmem:[%s0 + $0xe8] sm:$0xff]
    %v57 = vld [vmem:[%s0 + $0xf0] sm:$0xff]
    %v58 = vld [vmem:[%s0 + $0xf8] sm:$0xff]
    %v59 = vld [vmem:[%s1] sm:$0xff]
    %v60 = vld [vmem:[%s1 + $0x8] sm:$0xff]
    %v61 = vld [vmem:[%s2] sm:$0x1]
    %v63 = vperm.slane %v61, 0
    %vm65 = vcmask 130048
    %v67 = vsel %vm65, %v27, 0
    %v70 = vsel %vm65, %v28, 0
    %v73 = vsel %vm65, %v29, 0
    %v76 = vsel %vm65, %v30, 0
    %v79 = vsel %vm65, %v31, 0
    %v82 = vsel %vm65, %v32, 0
    %v85 = vsel %vm65, %v33, 0
    %v88 = vsel %vm65, %v34, 0
    %v91 = vsel %vm65, %v35, 0
    %v94 = vsel %vm65, %v36, 0
    %v97 = vsel %vm65, %v37, 0
    %v100 = vsel %vm65, %v38, 0
    %v103 = vsel %vm65, %v39, 0
    %v106 = vsel %vm65, %v40, 0
    %v109 = vsel %vm65, %v41, 0
    %v112 = vsel %vm65, %v42, 0
    %v115 = vsel %vm65, %v43, 0
    %v118 = vsel %vm65, %v44, 0
    %v121 = vsel %vm65, %v45, 0
    %v124 = vsel %vm65, %v46, 0
    %v127 = vsel %vm65, %v47, 0
    %v130 = vsel %vm65, %v48, 0
    %v133 = vsel %vm65, %v49, 0
    %v136 = vsel %vm65, %v50, 0
    %v139 = vsel %vm65, %v51, 0
    %v142 = vsel %vm65, %v52, 0
    %v145 = vsel %vm65, %v53, 0
    %v148 = vsel %vm65, %v54, 0
    %v151 = vsel %vm65, %v55, 0
    %v154 = vsel %vm65, %v56, 0
    %v157 = vsel %vm65, %v57, 0
    %v160 = vsel %vm65, %v58, 0
    %162 = vmatpush.msra.mxu0 0.0
    %163 = vmatpush.msra.mxu0 0.0
    %164 = vmatpush.msra.mxu0 0.0
    %165 = vmatpush.msra.mxu0 0.0
    %166 = vmatpush.msra.mxu0 0.0
    %167 = vmatpush.msra.mxu0 0.0
    %168 = vmatpush.msra.mxu0 0.0
    %169 = vmatpush.msra.mxu0 0.0
    %170 = vmatpush.msra.mxu0 0.0
    %171 = vmatpush.msra.mxu0 0.0
    %172 = vmatpush.msra.mxu0 0.0
    %173 = vmatpush.msra.mxu0 0.0
    %174 = vmatpush.msra.mxu0 0.0
    %175 = vmatpush.msra.mxu0 0.0
    %176 = vmatpush.msra.mxu0 %v60
    %177 = vmatpush.msra.mxu0 %v59
    %178 = vmatmul.f32.gmra.mxu0 %v67
    %v179 = vpop.f32.mrf.mxu0
    %v180 = vadd.f32 %v63, %v179
    %181 = vmatmul.f32.gmra.mxu0 %v70
    %v182 = vpop.f32.mrf.mxu0
    %v183 = vadd.f32 %v63, %v182
    %184 = vmatmul.f32.gmra.mxu0 %v73
    %v185 = vpop.f32.mrf.mxu0
    %v186 = vadd.f32 %v63, %v185
    %187 = vmatmul.f32.gmra.mxu0 %v76
    %v188 = vpop.f32.mrf.mxu0
    %v189 = vadd.f32 %v63, %v188
    %190 = vmatmul.f32.gmra.mxu0 %v79
    %v191 = vpop.f32.mrf.mxu0
    %v192 = vadd.f32 %v63, %v191
    %193 = vmatmul.f32.gmra.mxu0 %v82
    %v194 = vpop.f32.mrf.mxu0
    %v195 = vadd.f32 %v63, %v194
    %196 = vmatmul.f32.gmra.mxu0 %v85
    %v197 = vpop.f32.mrf.mxu0
    %v198 = vadd.f32 %v63, %v197
    %199 = vmatmul.f32.gmra.mxu0 %v88
    %v200 = vpop.f32.mrf.mxu0
    %v201 = vadd.f32 %v63, %v200
    %202 = vmatmul.f32.gmra.mxu0 %v91
    %v203 = vpop.f32.mrf.mxu0
    %v204 = vadd.f32 %v63, %v203
    %205 = vmatmul.f32.gmra.mxu0 %v94
    %v206 = vpop.f32.mrf.mxu0
    %v207 = vadd.f32 %v63, %v206
    %208 = vmatmul.f32.gmra.mxu0 %v97
    %v209 = vpop.f32.mrf.mxu0
    %v210 = vadd.f32 %v63, %v209
    %211 = vmatmul.f32.gmra.mxu0 %v100
    %v212 = vpop.f32.mrf.mxu0
    %v213 = vadd.f32 %v63, %v212
    %214 = vmatmul.f32.gmra.mxu0 %v103
    %v215 = vpop.f32.mrf.mxu0
    %v216 = vadd.f32 %v63, %v215
    %217 = vmatmul.f32.gmra.mxu0 %v106
    %v218 = vpop.f32.mrf.mxu0
    %v219 = vadd.f32 %v63, %v218
    %220 = vmatmul.f32.gmra.mxu0 %v109
    %v221 = vpop.f32.mrf.mxu0
    %v222 = vadd.f32 %v63, %v221
    %223 = vmatmul.f32.gmra.mxu0 %v112
    %v224 = vpop.f32.mrf.mxu0
    %v225 = vadd.f32 %v63, %v224
    %226 = vmatmul.f32.gmra.mxu0 %v115
    %v227 = vpop.f32.mrf.mxu0
    %v228 = vadd.f32 %v63, %v227
    %229 = vmatmul.f32.gmra.mxu0 %v118
    %v230 = vpop.f32.mrf.mxu0
    %v231 = vadd.f32 %v63, %v230
    %232 = vmatmul.f32.gmra.mxu0 %v121
    %v233 = vpop.f32.mrf.mxu0
    %v234 = vadd.f32 %v63, %v233
    %235 = vmatmul.f32.gmra.mxu0 %v124
    %v236 = vpop.f32.mrf.mxu0
    %v237 = vadd.f32 %v63, %v236
    %238 = vmatmul.f32.gmra.mxu0 %v127
    %v239 = vpop.f32.mrf.mxu0
    %v240 = vadd.f32 %v63, %v239
    %241 = vmatmul.f32.gmra.mxu0 %v130
    %v242 = vpop.f32.mrf.mxu0
    %v243 = vadd.f32 %v63, %v242
    %244 = vmatmul.f32.gmra.mxu0 %v133
    %v245 = vpop.f32.mrf.mxu0
    %v246 = vadd.f32 %v63, %v245
    %247 = vmatmul.f32.gmra.mxu0 %v136
    %v248 = vpop.f32.mrf.mxu0
    %v249 = vadd.f32 %v63, %v248
    %250 = vmatmul.f32.gmra.mxu0 %v139
    %v251 = vpop.f32.mrf.mxu0
    %v252 = vadd.f32 %v63, %v251
    %253 = vmatmul.f32.gmra.mxu0 %v142
    %v254 = vpop.f32.mrf.mxu0
    %v255 = vadd.f32 %v63, %v254
    %256 = vmatmul.f32.gmra.mxu0 %v145
    %v257 = vpop.f32.mrf.mxu0
    %v258 = vadd.f32 %v63, %v257
    %259 = vmatmul.f32.gmra.mxu0 %v148
    %v260 = vpop.f32.mrf.mxu0
    %v261 = vadd.f32 %v63, %v260
    %262 = vmatmul.f32.gmra.mxu0 %v151
    %v263 = vpop.f32.mrf.mxu0
    %v264 = vadd.f32 %v63, %v263
    %265 = vmatmul.f32.gmra.mxu0 %v154
    %v266 = vpop.f32.mrf.mxu0
    %v267 = vadd.f32 %v63, %v266
    %268 = vmatmul.f32.gmra.mxu0 %v157
    %v269 = vpop.f32.mrf.mxu0
    %v270 = vadd.f32 %v63, %v269
    %271 = vmatmul.f32.gmra.mxu0 %v160
    %v272 = vpop.f32.mrf.mxu0
    %v273 = vadd.f32 %v63, %v272
    %274 = vdwg.mxu0
    %v275 = vtanh.pop %v180
    %v276 = vtanh.pop %v183
    %v277 = vtanh.pop %v186
    %v278 = vtanh.pop %v189
    %v279 = vtanh.pop %v192
    %v280 = vtanh.pop %v195
    %v281 = vtanh.pop %v198
    %v282 = vtanh.pop %v201
    %v283 = vtanh.pop %v204
    %v284 = vtanh.pop %v207
    %v285 = vtanh.pop %v210
    %v286 = vtanh.pop %v213
    %v287 = vtanh.pop %v216
    %v288 = vtanh.pop %v219
    %v289 = vtanh.pop %v222
    %v290 = vtanh.pop %v225
    %v291 = vtanh.pop %v228
    %v292 = vtanh.pop %v231
    %v293 = vtanh.pop %v234
    %v294 = vtanh.pop %v237
    %v295 = vtanh.pop %v240
    %v296 = vtanh.pop %v243
    %v297 = vtanh.pop %v246
    %v298 = vtanh.pop %v249
    %v299 = vtanh.pop %v252
    %v300 = vtanh.pop %v255
    %v301 = vtanh.pop %v258
    %v302 = vtanh.pop %v261
    %v303 = vtanh.pop %v264
    %v304 = vtanh.pop %v267
    %v305 = vtanh.pop %v270
    %v306 = vtanh.pop %v273
    %v307 = vld [vmem:[%s3] sm:$0xff]
    %v308 = vld [vmem:[%s3 + $0x8] sm:$0xff]
    %v309 = vld [vmem:[%s3 + $0x10] sm:$0xff]
    %v310 = vld [vmem:[%s3 + $0x18] sm:$0xff]
    %v311 = vld [vmem:[%s3 + $0x20] sm:$0xff]
    %v312 = vld [vmem:[%s3 + $0x28] sm:$0xff]
    %v313 = vld [vmem:[%s3 + $0x30] sm:$0xff]
    %v314 = vld [vmem:[%s3 + $0x38] sm:$0xff]
    %v315 = vld [vmem:[%s4] sm:$0x1]
    %v317 = vperm.slane %v315, 0
    %vm319 = vcmask 523264
    %v321 = vsel %vm319, %v275, 0
    %v324 = vsel %vm319, %v276, 0
    %v327 = vsel %vm319, %v277, 0
    %v330 = vsel %vm319, %v278, 0
    %v333 = vsel %vm319, %v279, 0
    %v336 = vsel %vm319, %v280, 0
    %v339 = vsel %vm319, %v281, 0
    %v342 = vsel %vm319, %v282, 0
    %v345 = vsel %vm319, %v283, 0
    %v348 = vsel %vm319, %v284, 0
    %v351 = vsel %vm319, %v285, 0
    %v354 = vsel %vm319, %v286, 0
    %v357 = vsel %vm319, %v287, 0
    %v360 = vsel %vm319, %v288, 0
    %v363 = vsel %vm319, %v289, 0
    %v366 = vsel %vm319, %v290, 0
    %v369 = vsel %vm319, %v291, 0
    %v372 = vsel %vm319, %v292, 0
    %v375 = vsel %vm319, %v293, 0
    %v378 = vsel %vm319, %v294, 0
    %v381 = vsel %vm319, %v295, 0
    %v384 = vsel %vm319, %v296, 0
    %v387 = vsel %vm319, %v297, 0
    %v390 = vsel %vm319, %v298, 0
    %v393 = vsel %vm319, %v299, 0
    %v396 = vsel %vm319, %v300, 0
    %v399 = vsel %vm319, %v301, 0
    %v402 = vsel %vm319, %v302, 0
    %v405 = vsel %vm319, %v303, 0
    %v408 = vsel %vm319, %v304, 0
    %v411 = vsel %vm319, %v305, 0
    %v414 = vsel %vm319, %v306, 0
    %416 = vmatpush.msra.mxu0 0.0
    %417 = vmatpush.msra.mxu0 0.0
    %418 = vmatpush.msra.mxu0 0.0
    %419 = vmatpush.msra.mxu0 0.0
    %420 = vmatpush.msra.mxu0 0.0
    %421 = vmatpush.msra.mxu0 0.0
    %422 = vmatpush.msra.mxu0 0.0
    %423 = vmatpush.msra.mxu0 0.0
    %424 = vmatpush.msra.mxu0 %v314
    %425 = vmatpush.msra.mxu0 %v313
    %426 = vmatpush.msra.mxu0 %v312
    %427 = vmatpush.msra.mxu0 %v311
    %428 = vmatpush.msra.mxu0 %v310
    %429 = vmatpush.msra.mxu0 %v309
    %430 = vmatpush.msra.mxu0 %v308
    %431 = vmatpush.msra.mxu0 %v307
    %432 = vmatmul.f32.gmra.mxu0 %v321
    %v433 = vpop.f32.mrf.mxu0
    %v434 = vadd.f32 %v317, %v433
    %435 = vmatmul.f32.gmra.mxu0 %v324
    %v436 = vpop.f32.mrf.mxu0
    %v437 = vadd.f32 %v317, %v436
    %438 = vmatmul.f32.gmra.mxu0 %v327
    %v439 = vpop.f32.mrf.mxu0
    %v440 = vadd.f32 %v317, %v439
    %441 = vmatmul.f32.gmra.mxu0 %v330
    %v442 = vpop.f32.mrf.mxu0
    %v443 = vadd.f32 %v317, %v442
    %444 = vmatmul.f32.gmra.mxu0 %v333
    %v445 = vpop.f32.mrf.mxu0
    %v446 = vadd.f32 %v317, %v445
    %447 = vmatmul.f32.gmra.mxu0 %v336
    %v448 = vpop.f32.mrf.mxu0
    %v449 = vadd.f32 %v317, %v448
    %450 = vmatmul.f32.gmra.mxu0 %v339
    %v451 = vpop.f32.mrf.mxu0
    %v452 = vadd.f32 %v317, %v451
    %453 = vmatmul.f32.gmra.mxu0 %v342
    %v454 = vpop.f32.mrf.mxu0
    %v455 = vadd.f32 %v317, %v454
    %456 = vmatmul.f32.gmra.mxu0 %v345
    %v457 = vpop.f32.mrf.mxu0
    %v458 = vadd.f32 %v317, %v457
    %459 = vmatmul.f32.gmra.mxu0 %v348
    %v460 = vpop.f32.mrf.mxu0
    %v461 = vadd.f32 %v317, %v460
    %462 = vmatmul.f32.gmra.mxu0 %v351
    %v463 = vpop.f32.mrf.mxu0
    %v464 = vadd.f32 %v317, %v463
    %465 = vmatmul.f32.gmra.mxu0 %v354
    %v466 = vpop.f32.mrf.mxu0
    %v467 = vadd.f32 %v317, %v466
    %468 = vmatmul.f32.gmra.mxu0 %v357
    %v469 = vpop.f32.mrf.mxu0
    %v470 = vadd.f32 %v317, %v469
    %471 = vmatmul.f32.gmra.mxu0 %v360
    %v472 = vpop.f32.mrf.mxu0
    %v473 = vadd.f32 %v317, %v472
    %474 = vmatmul.f32.gmra.mxu0 %v363
    %v475 = vpop.f32.mrf.mxu0
    %v476 = vadd.f32 %v317, %v475
    %477 = vmatmul.f32.gmra.mxu0 %v366
    %v478 = vpop.f32.mrf.mxu0
    %v479 = vadd.f32 %v317, %v478
    %480 = vmatmul.f32.gmra.mxu0 %v369
    %v481 = vpop.f32.mrf.mxu0
    %v482 = vadd.f32 %v317, %v481
    %483 = vmatmul.f32.gmra.mxu0 %v372
    %v484 = vpop.f32.mrf.mxu0
    %v485 = vadd.f32 %v317, %v484
    %486 = vmatmul.f32.gmra.mxu0 %v375
    %v487 = vpop.f32.mrf.mxu0
    %v488 = vadd.f32 %v317, %v487
    %489 = vmatmul.f32.gmra.mxu0 %v378
    %v490 = vpop.f32.mrf.mxu0
    %v491 = vadd.f32 %v317, %v490
    %492 = vmatmul.f32.gmra.mxu0 %v381
    %v493 = vpop.f32.mrf.mxu0
    %v494 = vadd.f32 %v317, %v493
    %495 = vmatmul.f32.gmra.mxu0 %v384
    %v496 = vpop.f32.mrf.mxu0
    %v497 = vadd.f32 %v317, %v496
    %498 = vmatmul.f32.gmra.mxu0 %v387
    %v499 = vpop.f32.mrf.mxu0
    %v500 = vadd.f32 %v317, %v499
    %501 = vmatmul.f32.gmra.mxu0 %v390
    %v502 = vpop.f32.mrf.mxu0
    %v503 = vadd.f32 %v317, %v502
    %504 = vmatmul.f32.gmra.mxu0 %v393
    %v505 = vpop.f32.mrf.mxu0
    %v506 = vadd.f32 %v317, %v505
    %507 = vmatmul.f32.gmra.mxu0 %v396
    %v508 = vpop.f32.mrf.mxu0
    %v509 = vadd.f32 %v317, %v508
    %510 = vmatmul.f32.gmra.mxu0 %v399
    %v511 = vpop.f32.mrf.mxu0
    %v512 = vadd.f32 %v317, %v511
    %513 = vmatmul.f32.gmra.mxu0 %v402
    %v514 = vpop.f32.mrf.mxu0
    %v515 = vadd.f32 %v317, %v514
    %516 = vmatmul.f32.gmra.mxu0 %v405
    %v517 = vpop.f32.mrf.mxu0
    %v518 = vadd.f32 %v317, %v517
    %519 = vmatmul.f32.gmra.mxu0 %v408
    %v520 = vpop.f32.mrf.mxu0
    %v521 = vadd.f32 %v317, %v520
    %522 = vmatmul.f32.gmra.mxu0 %v411
    %v523 = vpop.f32.mrf.mxu0
    %v524 = vadd.f32 %v317, %v523
    %525 = vmatmul.f32.gmra.mxu0 %v414
    %v526 = vpop.f32.mrf.mxu0
    %v527 = vadd.f32 %v317, %v526
    %528 = vdwg.mxu0
    %v529 = vtanh.pop %v434
    %v530 = vtanh.pop %v437
    %v531 = vtanh.pop %v440
    %v532 = vtanh.pop %v443
    %v533 = vtanh.pop %v446
    %v534 = vtanh.pop %v449
    %v535 = vtanh.pop %v452
    %v536 = vtanh.pop %v455
    %v537 = vtanh.pop %v458
    %v538 = vtanh.pop %v461
    %v539 = vtanh.pop %v464
    %v540 = vtanh.pop %v467
    %v541 = vtanh.pop %v470
    %v542 = vtanh.pop %v473
    %v543 = vtanh.pop %v476
    %v544 = vtanh.pop %v479
    %v545 = vtanh.pop %v482
    %v546 = vtanh.pop %v485
    %v547 = vtanh.pop %v488
    %v548 = vtanh.pop %v491
    %v549 = vtanh.pop %v494
    %v550 = vtanh.pop %v497
    %v551 = vtanh.pop %v500
    %v552 = vtanh.pop %v503
    %v553 = vtanh.pop %v506
    %v554 = vtanh.pop %v509
    %v555 = vtanh.pop %v512
    %v556 = vtanh.pop %v515
    %v557 = vtanh.pop %v518
    %v558 = vtanh.pop %v521
    %v559 = vtanh.pop %v524
    %v560 = vtanh.pop %v527
    %v561 = vld [vmem:[%s5] sm:$0xff]
    %v562 = vld [vmem:[%s5 + $0x8] sm:$0xff]
    %v563 = vld [vmem:[%s5 + $0x10] sm:$0xff]
    %v564 = vld [vmem:[%s5 + $0x18] sm:$0xff]
    %v565 = vld [vmem:[%s5 + $0x20] sm:$0xff]
    %v566 = vld [vmem:[%s5 + $0x28] sm:$0xff]
    %v567 = vld [vmem:[%s5 + $0x30] sm:$0xff]
    %v568 = vld [vmem:[%s5 + $0x38] sm:$0xff]
    %v569 = vld [vmem:[%s6] sm:$0x1]
    %v571 = vperm.slane %v569, 0
    %v574 = vsel %vm319, %v529, 0
    %v577 = vsel %vm319, %v530, 0
    %v580 = vsel %vm319, %v531, 0
    %v583 = vsel %vm319, %v532, 0
    %v586 = vsel %vm319, %v533, 0
    %v589 = vsel %vm319, %v534, 0
    %v592 = vsel %vm319, %v535, 0
    %v595 = vsel %vm319, %v536, 0
    %v598 = vsel %vm319, %v537, 0
    %v601 = vsel %vm319, %v538, 0
    %v604 = vsel %vm319, %v539, 0
    %v607 = vsel %vm319, %v540, 0
    %v610 = vsel %vm319, %v541, 0
    %v613 = vsel %vm319, %v542, 0
    %v616 = vsel %vm319, %v543, 0
    %v619 = vsel %vm319, %v544, 0
    %v622 = vsel %vm319, %v545, 0
    %v625 = vsel %vm319, %v546, 0
    %v628 = vsel %vm319, %v547, 0
    %v631 = vsel %vm319, %v548, 0
    %v634 = vsel %vm319, %v549, 0
    %v637 = vsel %vm319, %v550, 0
    %v640 = vsel %vm319, %v551, 0
    %v643 = vsel %vm319, %v552, 0
    %v646 = vsel %vm319, %v553, 0
    %v649 = vsel %vm319, %v554, 0
    %v652 = vsel %vm319, %v555, 0
    %v655 = vsel %vm319, %v556, 0
    %v658 = vsel %vm319, %v557, 0
    %v661 = vsel %vm319, %v558, 0
    %v664 = vsel %vm319, %v559, 0
    %v667 = vsel %vm319, %v560, 0
    %669 = vmatpush.msra.mxu0 0.0
    %670 = vmatpush.msra.mxu0 0.0
    %671 = vmatpush.msra.mxu0 0.0
    %672 = vmatpush.msra.mxu0 0.0
    %673 = vmatpush.msra.mxu0 0.0
    %674 = vmatpush.msra.mxu0 0.0
    %675 = vmatpush.msra.mxu0 0.0
    %676 = vmatpush.msra.mxu0 0.0
    %677 = vmatpush.msra.mxu0 %v568
    %678 = vmatpush.msra.mxu0 %v567
    %679 = vmatpush.msra.mxu0 %v566
    %680 = vmatpush.msra.mxu0 %v565
    %681 = vmatpush.msra.mxu0 %v564
    %682 = vmatpush.msra.mxu0 %v563
    %683 = vmatpush.msra.mxu0 %v562
    %684 = vmatpush.msra.mxu0 %v561
    %685 = vmatmul.f32.gmra.mxu0 %v574
    %v686 = vpop.f32.mrf.mxu0
    %v687 = vadd.f32 %v571, %v686
    %688 = vmatmul.f32.gmra.mxu0 %v577
    %v689 = vpop.f32.mrf.mxu0
    %v690 = vadd.f32 %v571, %v689
    %691 = vmatmul.f32.gmra.mxu0 %v580
    %v692 = vpop.f32.mrf.mxu0
    %v693 = vadd.f32 %v571, %v692
    %694 = vmatmul.f32.gmra.mxu0 %v583
    %v695 = vpop.f32.mrf.mxu0
    %v696 = vadd.f32 %v571, %v695
    %697 = vmatmul.f32.gmra.mxu0 %v586
    %v698 = vpop.f32.mrf.mxu0
    %v699 = vadd.f32 %v571, %v698
    %700 = vmatmul.f32.gmra.mxu0 %v589
    %v701 = vpop.f32.mrf.mxu0
    %v702 = vadd.f32 %v571, %v701
    %703 = vmatmul.f32.gmra.mxu0 %v592
    %v704 = vpop.f32.mrf.mxu0
    %v705 = vadd.f32 %v571, %v704
    %706 = vmatmul.f32.gmra.mxu0 %v595
    %v707 = vpop.f32.mrf.mxu0
    %v708 = vadd.f32 %v571, %v707
    %709 = vmatmul.f32.gmra.mxu0 %v598
    %v710 = vpop.f32.mrf.mxu0
    %v711 = vadd.f32 %v571, %v710
    %712 = vmatmul.f32.gmra.mxu0 %v601
    %v713 = vpop.f32.mrf.mxu0
    %v714 = vadd.f32 %v571, %v713
    %715 = vmatmul.f32.gmra.mxu0 %v604
    %v716 = vpop.f32.mrf.mxu0
    %v717 = vadd.f32 %v571, %v716
    %718 = vmatmul.f32.gmra.mxu0 %v607
    %v719 = vpop.f32.mrf.mxu0
    %v720 = vadd.f32 %v571, %v719
    %721 = vmatmul.f32.gmra.mxu0 %v610
    %v722 = vpop.f32.mrf.mxu0
    %v723 = vadd.f32 %v571, %v722
    %724 = vmatmul.f32.gmra.mxu0 %v613
    %v725 = vpop.f32.mrf.mxu0
    %v726 = vadd.f32 %v571, %v725
    %727 = vmatmul.f32.gmra.mxu0 %v616
    %v728 = vpop.f32.mrf.mxu0
    %v729 = vadd.f32 %v571, %v728
    %730 = vmatmul.f32.gmra.mxu0 %v619
    %v731 = vpop.f32.mrf.mxu0
    %v732 = vadd.f32 %v571, %v731
    %733 = vmatmul.f32.gmra.mxu0 %v622
    %v734 = vpop.f32.mrf.mxu0
    %v735 = vadd.f32 %v571, %v734
    %736 = vmatmul.f32.gmra.mxu0 %v625
    %v737 = vpop.f32.mrf.mxu0
    %v738 = vadd.f32 %v571, %v737
    %739 = vmatmul.f32.gmra.mxu0 %v628
    %v740 = vpop.f32.mrf.mxu0
    %v741 = vadd.f32 %v571, %v740
    %742 = vmatmul.f32.gmra.mxu0 %v631
    %v743 = vpop.f32.mrf.mxu0
    %v744 = vadd.f32 %v571, %v743
    %745 = vmatmul.f32.gmra.mxu0 %v634
    %v746 = vpop.f32.mrf.mxu0
    %v747 = vadd.f32 %v571, %v746
    %748 = vmatmul.f32.gmra.mxu0 %v637
    %v749 = vpop.f32.mrf.mxu0
    %v750 = vadd.f32 %v571, %v749
    %751 = vmatmul.f32.gmra.mxu0 %v640
    %v752 = vpop.f32.mrf.mxu0
    %v753 = vadd.f32 %v571, %v752
    %754 = vmatmul.f32.gmra.mxu0 %v643
    %v755 = vpop.f32.mrf.mxu0
    %v756 = vadd.f32 %v571, %v755
    %757 = vmatmul.f32.gmra.mxu0 %v646
    %v758 = vpop.f32.mrf.mxu0
    %v759 = vadd.f32 %v571, %v758
    %760 = vmatmul.f32.gmra.mxu0 %v649
    %v761 = vpop.f32.mrf.mxu0
    %v762 = vadd.f32 %v571, %v761
    %763 = vmatmul.f32.gmra.mxu0 %v652
    %v764 = vpop.f32.mrf.mxu0
    %v765 = vadd.f32 %v571, %v764
    %766 = vmatmul.f32.gmra.mxu0 %v655
    %v767 = vpop.f32.mrf.mxu0
    %v768 = vadd.f32 %v571, %v767
    %769 = vmatmul.f32.gmra.mxu0 %v658
    %v770 = vpop.f32.mrf.mxu0
    %v771 = vadd.f32 %v571, %v770
    %772 = vmatmul.f32.gmra.mxu0 %v661
    %v773 = vpop.f32.mrf.mxu0
    %v774 = vadd.f32 %v571, %v773
    %775 = vmatmul.f32.gmra.mxu0 %v664
    %v776 = vpop.f32.mrf.mxu0
    %v777 = vadd.f32 %v571, %v776
    %778 = vmatmul.f32.gmra.mxu0 %v667
    %v779 = vpop.f32.mrf.mxu0
    %v780 = vadd.f32 %v571, %v779
    %781 = vdwg.mxu0
    %782 = vst [vmem:[#allocation2] sm:$0xff] %v687
    %783 = vst [vmem:[#allocation2 + $0x8] sm:$0xff] %v690
    %784 = vst [vmem:[#allocation2 + $0x10] sm:$0xff] %v693
    %785 = vst [vmem:[#allocation2 + $0x18] sm:$0xff] %v696
    %786 = vst [vmem:[#allocation2 + $0x20] sm:$0xff] %v699
    %787 = vst [vmem:[#allocation2 + $0x28] sm:$0xff] %v702
    %788 = vst [vmem:[#allocation2 + $0x30] sm:$0xff] %v705
    %789 = vst [vmem:[#allocation2 + $0x38] sm:$0xff] %v708
    %790 = vst [vmem:[#allocation2 + $0x40] sm:$0xff] %v711
    %791 = vst [vmem:[#allocation2 + $0x48] sm:$0xff] %v714
    %792 = vst [vmem:[#allocation2 + $0x50] sm:$0xff] %v717
    %793 = vst [vmem:[#allocation2 + $0x58] sm:$0xff] %v720
    %794 = vst [vmem:[#allocation2 + $0x60] sm:$0xff] %v723
    %795 = vst [vmem:[#allocation2 + $0x68] sm:$0xff] %v726
    %796 = vst [vmem:[#allocation2 + $0x70] sm:$0xff] %v729
    %797 = vst [vmem:[#allocation2 + $0x78] sm:$0xff] %v732
    %798 = vst [vmem:[#allocation2 + $0x80] sm:$0xff] %v735
    %799 = vst [vmem:[#allocation2 + $0x88] sm:$0xff] %v738
    %800 = vst [vmem:[#allocation2 + $0x90] sm:$0xff] %v741
    %801 = vst [vmem:[#allocation2 + $0x98] sm:$0xff] %v744
    %802 = vst [vmem:[#allocation2 + $0xa0] sm:$0xff] %v747
    %803 = vst [vmem:[#allocation2 + $0xa8] sm:$0xff] %v750
    %804 = vst [vmem:[#allocation2 + $0xb0] sm:$0xff] %v753
    %805 = vst [vmem:[#allocation2 + $0xb8] sm:$0xff] %v756
    %806 = vst [vmem:[#allocation2 + $0xc0] sm:$0xff] %v759
    %807 = vst [vmem:[#allocation2 + $0xc8] sm:$0xff] %v762
    %808 = vst [vmem:[#allocation2 + $0xd0] sm:$0xff] %v765
    %809 = vst [vmem:[#allocation2 + $0xd8] sm:$0xff] %v768
    %810 = vst [vmem:[#allocation2 + $0xe0] sm:$0xff] %v771
    %811 = vst [vmem:[#allocation2 + $0xe8] sm:$0xff] %v774
    %812 = vst [vmem:[#allocation2 + $0xf0] sm:$0xff] %v777
    %813 = vst [vmem:[#allocation2 + $0xf8] sm:$0xff] %v780
    // Predicated region
    $region30: #{tpu_custom_call.1} parent=1 // pred_check
      _
    $region31: #{tpu_custom_call.1} parent=1 // pred_check_branch
      %815 = sbr.rel (0) target = $region33
    $region32: #{tpu_custom_call.1} parent=1 // pred_region
      %817 = vsyncadd [#allocation3], 0
      %s818 = sshll.u32 [#allocation2], 4
      %s819 = int_to_ptr.vmem [resolvable:$true] %s818
      %s820 = sshll.u32 %s7, 4
      %s821 = int_to_ptr.hbm [resolvable:$true] %s820
      %826 = dma.vmem_to_hbm [thread:$0]  %s819, 4096, %s821, [#allocation3], 128, 128, 8
    $region33: #{tpu_custom_call.1} parent=1 // pred_fallthru
      _
    // Predicated region
    $region34: #{tpu_custom_call.1} parent=1 // pred_check
      _
    $region35: #{tpu_custom_call.1} parent=1 // pred_check_branch
      %828 = sbr.rel (0) target = $region37
    $region36: #{tpu_custom_call.1} parent=1 // pred_region
      %830 = dma.done [#allocation3], 4096
    $region37: #{tpu_custom_call.1} parent=1 // pred_fallthru
      _
    %831 = vsyncpa [#allocation3], 1

</llo_original>
